<compile_context>
chip_gen: v6e
topology: v6e:2x2x1
jax: 0.10.0
libtpu: 0.0.40
codegen_flags: <defaults>
</compile_context>

<pallas_src>
import functools

import jax
import jax.numpy as jnp
from jax.experimental import pallas as pl
from jax.experimental.pallas import tpu as pltpu


def _attention_kernel(x_ref, wq_ref, wkv_ref, wo_ref, bo_ref, o_ref,
                      kv_ref, ob_ref, *, scale, heads, dim_head, tq, n_seq):
    iq = pl.program_id(1)
    inner = heads * dim_head

    # ---- K/V projection: once per batch element, cached across q-tiles. ----
    @pl.when(iq == 0)
    def _():
        x_all = x_ref[0].astype(jnp.bfloat16)                       # (n, dim)
        kv = jnp.dot(x_all, wkv_ref[...],
                     preferred_element_type=jnp.float32)            # (n, 2*inner)
        kv_ref[...] = kv.astype(jnp.bfloat16)

    # ---- Q projection for this query tile: one wide (dim -> inner) matmul. ----
    if tq == n_seq:
        xq = x_ref[0]                                                # (tq, dim)
    else:
        start = pl.multiple_of(iq * tq, tq)
        xq = x_ref[0, pl.ds(start, tq), :]
    q_all = jnp.dot(xq.astype(jnp.bfloat16), wq_ref[...],
                    preferred_element_type=jnp.float32)              # (tq, inner)
    # Fold the softmax scale into q (tq*inner elems, not tq*n score elems).
    q_all = (q_all * scale).astype(jnp.bfloat16)

    # ---- Per-head attention; heads live fully inside the kernel. ----
    for h in range(heads):
        lo, hi = h * dim_head, (h + 1) * dim_head
        q_h = q_all[:, lo:hi]                                        # (tq, d) bf16
        k_h = kv_ref[:, lo:hi]                                       # (n, d)  bf16
        v_h = kv_ref[:, inner + lo:inner + hi]                       # (n, d)  bf16

        dots = jnp.einsum("qd,kd->qk", q_h, k_h,
                          preferred_element_type=jnp.float32)        # (tq, n)
        m = jnp.max(dots, axis=-1, keepdims=True)
        p = jnp.exp(dots - m)                                        # unnormalized
        s = jnp.sum(p, axis=-1, keepdims=True)

        out_h = jnp.dot(p.astype(jnp.bfloat16), v_h,
                        preferred_element_type=jnp.float32)          # (tq, d)
        # Deferred softmax normalization: EUP reciprocal + small multiply.
        out_h = out_h * pl.reciprocal(s, approx=True)
        ob_ref[:, lo:hi] = out_h.astype(jnp.bfloat16)

    # ---- Output projection + bias: one wide K=inner matmul per output tile. ----
    o = jnp.dot(ob_ref[...], wo_ref[...], preferred_element_type=jnp.float32)
    o_ref[0] = (o + bo_ref[...]).astype(o_ref.dtype)


@functools.partial(jax.jit, static_argnames=("heads", "dim_head"))
def attention(x, w_qkv, w_out, b_out, *, heads, dim_head):
    """x: (batch, n, dim). w_qkv: (dim, 3*inner) = to_qkv.weight.T (no bias).
    w_out: (inner, dim) = to_out[0].weight.T. b_out: (dim,)."""
    b, n, dim = x.shape
    inner = heads * dim_head
    assert w_qkv.shape == (dim, 3 * inner)
    assert w_out.shape == (inner, dim)
    scale = float(dim_head) ** -0.5

    # bf16 MXU operands (f32 accumulation happens inside the kernel).
    w_q = w_qkv[:, :inner].astype(jnp.bfloat16)            # (dim, inner)
    w_kv = w_qkv[:, inner:].astype(jnp.bfloat16)           # (dim, 2*inner) = [K | V]
    w_o = w_out.astype(jnp.bfloat16)                       # (inner, dim)
    b_o = b_out.reshape(1, dim).astype(jnp.float32)

    # Query tiling (single tile at small n; 512-row tiles for long sequences).
    tq = n if n <= 512 else 512
    assert n % tq == 0, "sequence length must be divisible by the query tile"
    grid = (b, n // tq)

    kernel = functools.partial(_attention_kernel, scale=scale, heads=heads,
                               dim_head=dim_head, tq=tq, n_seq=n)
    return pl.pallas_call(
        kernel,
        out_shape=jax.ShapeDtypeStruct((b, n, dim), x.dtype),
        grid_spec=pltpu.PrefetchScalarGridSpec(
            num_scalar_prefetch=0,
            grid=grid,
            in_specs=[
                # x: resident across q-tiles for the current batch element.
                pl.BlockSpec((1, n, dim), lambda ib, iq: (ib, 0, 0)),
                # Weights: grid-invariant -> VMEM-resident, DMA'd once.
                pl.BlockSpec((dim, inner), lambda ib, iq: (0, 0)),
                pl.BlockSpec((dim, 2 * inner), lambda ib, iq: (0, 0)),
                pl.BlockSpec((inner, dim), lambda ib, iq: (0, 0)),
                pl.BlockSpec((1, dim), lambda ib, iq: (0, 0)),
            ],
            out_specs=pl.BlockSpec((1, tq, dim), lambda ib, iq: (ib, iq, 0)),
            scratch_shapes=[
                pltpu.VMEM((n, 2 * inner), jnp.bfloat16),   # cached K/V projections
                pltpu.VMEM((tq, inner), jnp.bfloat16),      # per-head output collector
            ],
        ),
        compiler_params=pltpu.CompilerParams(
            # batch axis shards across TensorCores (v7x); q-tile axis carries the
            # cached K/V scratch -> must stay "arbitrary".
            dimension_semantics=("parallel", "arbitrary"),
            # Default-safe everywhere (v7x 64 MiB physical); raise for long-seq
            # configs on v5e/v6e (128 MiB) to allow bigger tiles.
            vmem_limit_bytes=32 * 1024 * 1024,
        ),
    )(x, w_q, w_kv, w_o, b_o)


def _reference(x, w_qkv, w_out, b_out, heads, dim_head):
    b, n, dim = x.shape
    inner = heads * dim_head
    qkv = jnp.einsum("bnd,de->bne", x, w_qkv)
    q, k, v = jnp.split(qkv, 3, axis=-1)

    def split_heads(t):
        return t.reshape(b, n, heads, dim_head).transpose(0, 2, 1, 3)

    q, k, v = split_heads(q), split_heads(k), split_heads(v)
    dots = jnp.einsum("bhid,bhjd->bhij", q, k) * (float(dim_head) ** -0.5)
    attn = jax.nn.softmax(dots, axis=-1)
    out = jnp.einsum("bhij,bhjd->bhid", attn, v)
    out = out.transpose(0, 2, 1, 3).reshape(b, n, inner)
    return jnp.einsum("bni,id->bnd", out, w_out) + b_out


if __name__ == "__main__":
    # Module defaults (heads=8, dim_head=64) at small shapes; dim=128 keeps the
    # output lane-dense. inner_dim = 512 != dim -> project_out=True, as in PyTorch.
    batch, seq, dim = 2, 16, 128
    heads, dim_head = 8, 64
    inner = heads * dim_head

    key = jax.random.PRNGKey(0)
    kx, kqkv, kwo, kbo = jax.random.split(key, 4)

    x = jax.random.normal(kx, (batch, seq, dim), dtype=jnp.float32)

    # Deterministic params (uniform, roughly nn.Linear's init scale), stored as
    # "weight.T" so the forward is plain x @ W (+ b).
    lim_qkv = 1.0 / float(dim) ** 0.5
    lim_out = 1.0 / float(inner) ** 0.5
    w_qkv = jax.random.uniform(kqkv, (dim, 3 * inner), jnp.float32, -lim_qkv, lim_qkv)
    w_out = jax.random.uniform(kwo, (inner, dim), jnp.float32, -lim_out, lim_out)
    b_out = jax.random.uniform(kbo, (dim,), jnp.float32, -lim_out, lim_out)

    out = attention(x, w_qkv, w_out, b_out, heads=heads, dim_head=dim_head)
    out = jax.block_until_ready(out)

    ref = _reference(x, w_qkv, w_out, b_out, heads, dim_head)
    assert out.shape == (batch, seq, dim)
    # bf16 MXU operands with f32 accumulation -> looser tolerance than pure f32.
    max_err = float(jnp.max(jnp.abs(out - ref)))
    assert jnp.allclose(out, ref, atol=5e-2, rtol=5e-2), (
        f"mismatch vs reference (max abs err {max_err})")

    print("KERNEL_OK")
</pallas_src>

<mosaic_0001>
module attributes {stable_mosaic.version = 11 : i64} {
  func.func @_attention_kernel(%arg0: i32, %arg1: i32, %arg2: memref<1x16x128xf32, #tpu.memory_space<vmem>>, %arg3: memref<128x512xbf16, #tpu.memory_space<vmem>>, %arg4: memref<128x1024xbf16, #tpu.memory_space<vmem>>, %arg5: memref<512x128xbf16, #tpu.memory_space<vmem>>, %arg6: memref<1x128xf32, #tpu.memory_space<vmem>>, %arg7: memref<1x16x128xf32, #tpu.memory_space<vmem>>, %arg8: memref<16x1024xbf16, #tpu.memory_space<vmem>>, %arg9: memref<16x512xbf16, #tpu.memory_space<vmem>>) attributes {dimension_semantics = [#tpu.dimension_semantics<parallel>, #tpu.dimension_semantics<arbitrary>], iteration_bounds = array<i64: 2, 1>, scalar_prefetch = 0 : i64, scratch_operands = 2 : i64, tpu.core_type = #tpu.core_type<tc>, window_params = [{transform_indices = @transform_0, window_bounds = array<i64: 1, 16, 128>}, {pipeline_mode = #tpu.pipeline_mode<synchronous>, transform_indices = @transform_1, window_bounds = array<i64: 128, 512>}, {pipeline_mode = #tpu.pipeline_mode<synchronous>, transform_indices = @transform_2, window_bounds = array<i64: 128, 1024>}, {pipeline_mode = #tpu.pipeline_mode<synchronous>, transform_indices = @transform_3, window_bounds = array<i64: 512, 128>}, {pipeline_mode = #tpu.pipeline_mode<synchronous>, transform_indices = @transform_4, window_bounds = array<i64: 1, 128>}, {transform_indices = @transform_5, window_bounds = array<i64: 1, 16, 128>}]} {
    %c0_i32 = arith.constant 0 : i32
    %0 = arith.cmpi eq, %arg1, %c0_i32 : i32
    %1 = arith.extui %0 : i1 to i32
    %c0_i32_0 = arith.constant 0 : i32
    %2 = arith.cmpi ne, %1, %c0_i32_0 : i32
    scf.if %2 {
      %c0_81 = arith.constant 0 : index
      %c0_82 = arith.constant 0 : index
      %c0_83 = arith.constant 0 : index
      %164 = vector.load %arg2[%c0_81, %c0_82, %c0_83] : memref<1x16x128xf32, #tpu.memory_space<vmem>>, vector<1x16x128xf32>
      %165 = vector.shape_cast %164 : vector<1x16x128xf32> to vector<16x128xf32>
      %166 = arith.truncf %165 : vector<16x128xf32> to vector<16x128xbf16>
      %c0_84 = arith.constant 0 : index
      %c0_85 = arith.constant 0 : index
      %167 = vector.load %arg4[%c0_84, %c0_85] : memref<128x1024xbf16, #tpu.memory_space<vmem>>, vector<128x1024xbf16>
      %cst_86 = arith.constant dense<0.000000e+00> : vector<16x1024xf32>
      %168 = tpu.matmul %166, %167, %cst_86 {dimension_numbers = #tpu.dot_dimension_numbers<[1], [0], [0], [1], [0, 0, 1, 1], [], []>} : vector<16x128xbf16>, vector<128x1024xbf16>, vector<16x1024xf32> -> vector<16x1024xf32>
      %169 = arith.truncf %168 : vector<16x1024xf32> to vector<16x1024xbf16>
      %c0_87 = arith.constant 0 : index
      %c0_88 = arith.constant 0 : index
      %170 = vector.load %arg8[%c0_87, %c0_88] : memref<16x1024xbf16, #tpu.memory_space<vmem>>, vector<16x1024xbf16>
      tpu.vector_store %arg8[%c0_87, %c0_88], %169 {strides = array<i32>} : memref<16x1024xbf16, #tpu.memory_space<vmem>>, vector<16x1024xbf16>,
    } else {
    }
    %c0 = arith.constant 0 : index
    %c0_1 = arith.constant 0 : index
    %c0_2 = arith.constant 0 : index
    %3 = vector.load %arg2[%c0, %c0_1, %c0_2] : memref<1x16x128xf32, #tpu.memory_space<vmem>>, vector<1x16x128xf32>
    %4 = vector.shape_cast %3 : vector<1x16x128xf32> to vector<16x128xf32>
    %5 = arith.truncf %4 : vector<16x128xf32> to vector<16x128xbf16>
    %c0_3 = arith.constant 0 : index
    %c0_4 = arith.constant 0 : index
    %6 = vector.load %arg3[%c0_3, %c0_4] : memref<128x512xbf16, #tpu.memory_space<vmem>>, vector<128x512xbf16>
    %cst = arith.constant dense<0.000000e+00> : vector<16x512xf32>
    %7 = tpu.matmul %5, %6, %cst {dimension_numbers = #tpu.dot_dimension_numbers<[1], [0], [0], [1], [0, 0, 1, 1], [], []>} : vector<16x128xbf16>, vector<128x512xbf16>, vector<16x512xf32> -> vector<16x512xf32>
    %cst_5 = arith.constant 1.250000e-01 : f32
    %8 = vector.broadcast %cst_5 : f32 to vector<16x512xf32>
    %9 = arith.mulf %7, %8 : vector<16x512xf32>
    %10 = arith.truncf %9 : vector<16x512xf32> to vector<16x512xbf16>
    %11 = vector.extract_strided_slice %10 {offsets = [0, 0], sizes = [16, 64], strides = [1, 1]} : vector<16x512xbf16> to vector<16x64xbf16>
    %c0_6 = arith.constant 0 : index
    %c0_7 = arith.constant 0 : index
    %12 = vector.load %arg8[%c0_6, %c0_7] : memref<16x1024xbf16, #tpu.memory_space<vmem>>, vector<16x64xbf16>
    %c0_8 = arith.constant 0 : index
    %c512 = arith.constant 512 : index
    %13 = vector.load %arg8[%c0_8, %c512] : memref<16x1024xbf16, #tpu.memory_space<vmem>>, vector<16x64xbf16>
    "tpu.trace_start"() <{level = 10 : i32, message = "qd,kd->qk"}> : () -> ()
    %cst_9 = arith.constant dense<0.000000e+00> : vector<16x16xf32>
    %14 = tpu.matmul %11, %12, %cst_9 {dimension_numbers = #tpu.dot_dimension_numbers<[1], [1], [0], [0], [0, 0, 1, 0], [], []>} : vector<16x64xbf16>, vector<16x64xbf16>, vector<16x16xf32> -> vector<16x16xf32>
    "tpu.trace_stop"() : () -> ()
    %cst_10 = arith.constant dense<0xFF800000> : vector<16xf32>
    %15 = vector.multi_reduction <maximumf>, %14, %cst_10 [1] : vector<16x16xf32> to vector<16xf32>
    %16 = vector.shape_cast %15 : vector<16xf32> to vector<16x1xf32>
    %17 = vector.broadcast %16 : vector<16x1xf32> to vector<16x16xf32>
    %18 = arith.subf %14, %17 : vector<16x16xf32>
    %19 = math.exp %18 : vector<16x16xf32>
    %cst_11 = arith.constant dense<0.000000e+00> : vector<16xf32>
    %20 = vector.multi_reduction <add>, %19, %cst_11 [1] : vector<16x16xf32> to vector<16xf32>
    %21 = vector.shape_cast %20 : vector<16xf32> to vector<16x1xf32>
    %22 = arith.truncf %19 : vector<16x16xf32> to vector<16x16xbf16>
    %cst_12 = arith.constant dense<0.000000e+00> : vector<16x64xf32>
    %23 = tpu.matmul %22, %13, %cst_12 {dimension_numbers = #tpu.dot_dimension_numbers<[1], [0], [0], [1], [0, 0, 1, 1], [], []>} : vector<16x16xbf16>, vector<16x64xbf16>, vector<16x64xf32> -> vector<16x64xf32>
    %24 = tpu.reciprocal %21 {approx = true} : vector<16x1xf32> -> vector<16x1xf32>
    %25 = vector.broadcast %24 : vector<16x1xf32> to vector<16x64xf32>
    %26 = arith.mulf %23, %25 : vector<16x64xf32>
    %27 = arith.truncf %26 : vector<16x64xf32> to vector<16x64xbf16>
    %c0_13 = arith.constant 0 : index
    %c0_14 = arith.constant 0 : index
    %28 = vector.load %arg9[%c0_13, %c0_14] : memref<16x512xbf16, #tpu.memory_space<vmem>>, vector<16x64xbf16>
    tpu.vector_store %arg9[%c0_13, %c0_14], %27 {strides = array<i32>} : memref<16x512xbf16, #tpu.memory_space<vmem>>, vector<16x64xbf16>,
    %29 = vector.extract_strided_slice %10 {offsets = [0, 64], sizes = [16, 64], strides = [1, 1]} : vector<16x512xbf16> to vector<16x64xbf16>
    %c0_15 = arith.constant 0 : index
    %c64 = arith.constant 64 : index
    %30 = vector.load %arg8[%c0_15, %c64] : memref<16x1024xbf16, #tpu.memory_space<vmem>>, vector<16x64xbf16>
    %c0_16 = arith.constant 0 : index
    %c576 = arith.constant 576 : index
    %31 = vector.load %arg8[%c0_16, %c576] : memref<16x1024xbf16, #tpu.memory_space<vmem>>, vector<16x64xbf16>
    "tpu.trace_start"() <{level = 10 : i32, message = "qd,kd->qk"}> : () -> ()
    %cst_17 = arith.constant dense<0.000000e+00> : vector<16x16xf32>
    %32 = tpu.matmul %29, %30, %cst_17 {dimension_numbers = #tpu.dot_dimension_numbers<[1], [1], [0], [0], [0, 0, 1, 0], [], []>} : vector<16x64xbf16>, vector<16x64xbf16>, vector<16x16xf32> -> vector<16x16xf32>
    "tpu.trace_stop"() : () -> ()
    %cst_18 = arith.constant dense<0xFF800000> : vector<16xf32>
    %33 = vector.multi_reduction <maximumf>, %32, %cst_18 [1] : vector<16x16xf32> to vector<16xf32>
    %34 = vector.shape_cast %33 : vector<16xf32> to vector<16x1xf32>
    %35 = vector.broadcast %34 : vector<16x1xf32> to vector<16x16xf32>
    %36 = arith.subf %32, %35 : vector<16x16xf32>
    %37 = math.exp %36 : vector<16x16xf32>
    %cst_19 = arith.constant dense<0.000000e+00> : vector<16xf32>
    %38 = vector.multi_reduction <add>, %37, %cst_19 [1] : vector<16x16xf32> to vector<16xf32>
    %39 = vector.shape_cast %38 : vector<16xf32> to vector<16x1xf32>
    %40 = arith.truncf %37 : vector<16x16xf32> to vector<16x16xbf16>
    %cst_20 = arith.constant dense<0.000000e+00> : vector<16x64xf32>
    %41 = tpu.matmul %40, %31, %cst_20 {dimension_numbers = #tpu.dot_dimension_numbers<[1], [0], [0], [1], [0, 0, 1, 1], [], []>} : vector<16x16xbf16>, vector<16x64xbf16>, vector<16x64xf32> -> vector<16x64xf32>
    %42 = tpu.reciprocal %39 {approx = true} : vector<16x1xf32> -> vector<16x1xf32>
    %43 = vector.broadcast %42 : vector<16x1xf32> to vector<16x64xf32>
    %44 = arith.mulf %41, %43 : vector<16x64xf32>
    %45 = arith.truncf %44 : vector<16x64xf32> to vector<16x64xbf16>
    %c0_21 = arith.constant 0 : index
    %c64_22 = arith.constant 64 : index
    %46 = vector.load %arg9[%c0_21, %c64_22] : memref<16x512xbf16, #tpu.memory_space<vmem>>, vector<16x64xbf16>
    tpu.vector_store %arg9[%c0_21, %c64_22], %45 {strides = array<i32>} : memref<16x512xbf16, #tpu.memory_space<vmem>>, vector<16x64xbf16>,
    %47 = vector.extract_strided_slice %10 {offsets = [0, 128], sizes = [16, 64], strides = [1, 1]} : vector<16x512xbf16> to vector<16x64xbf16>
    %c0_23 = arith.constant 0 : index
    %c128 = arith.constant 128 : index
    %48 = vector.load %arg8[%c0_23, %c128] : memref<16x1024xbf16, #tpu.memory_space<vmem>>, vector<16x64xbf16>
    %c0_24 = arith.constant 0 : index
    %c640 = arith.constant 640 : index
    %49 = vector.load %arg8[%c0_24, %c640] : memref<16x1024xbf16, #tpu.memory_space<vmem>>, vector<16x64xbf16>
    "tpu.trace_start"() <{level = 10 : i32, message = "qd,kd->qk"}> : () -> ()
    %cst_25 = arith.constant dense<0.000000e+00> : vector<16x16xf32>
    %50 = tpu.matmul %47, %48, %cst_25 {dimension_numbers = #tpu.dot_dimension_numbers<[1], [1], [0], [0], [0, 0, 1, 0], [], []>} : vector<16x64xbf16>, vector<16x64xbf16>, vector<16x16xf32> -> vector<16x16xf32>
    "tpu.trace_stop"() : () -> ()
    %cst_26 = arith.constant dense<0xFF800000> : vector<16xf32>
    %51 = vector.multi_reduction <maximumf>, %50, %cst_26 [1] : vector<16x16xf32> to vector<16xf32>
    %52 = vector.shape_cast %51 : vector<16xf32> to vector<16x1xf32>
    %53 = vector.broadcast %52 : vector<16x1xf32> to vector<16x16xf32>
    %54 = arith.subf %50, %53 : vector<16x16xf32>
    %55 = math.exp %54 : vector<16x16xf32>
    %cst_27 = arith.constant dense<0.000000e+00> : vector<16xf32>
    %56 = vector.multi_reduction <add>, %55, %cst_27 [1] : vector<16x16xf32> to vector<16xf32>
    %57 = vector.shape_cast %56 : vector<16xf32> to vector<16x1xf32>
    %58 = arith.truncf %55 : vector<16x16xf32> to vector<16x16xbf16>
    %cst_28 = arith.constant dense<0.000000e+00> : vector<16x64xf32>
    %59 = tpu.matmul %58, %49, %cst_28 {dimension_numbers = #tpu.dot_dimension_numbers<[1], [0], [0], [1], [0, 0, 1, 1], [], []>} : vector<16x16xbf16>, vector<16x64xbf16>, vector<16x64xf32> -> vector<16x64xf32>
    %60 = tpu.reciprocal %57 {approx = true} : vector<16x1xf32> -> vector<16x1xf32>
    %61 = vector.broadcast %60 : vector<16x1xf32> to vector<16x64xf32>
    %62 = arith.mulf %59, %61 : vector<16x64xf32>
    %63 = arith.truncf %62 : vector<16x64xf32> to vector<16x64xbf16>
    %c0_29 = arith.constant 0 : index
    %c128_30 = arith.constant 128 : index
    %64 = vector.load %arg9[%c0_29, %c128_30] : memref<16x512xbf16, #tpu.memory_space<vmem>>, vector<16x64xbf16>
    tpu.vector_store %arg9[%c0_29, %c128_30], %63 {strides = array<i32>} : memref<16x512xbf16, #tpu.memory_space<vmem>>, vector<16x64xbf16>,
    %65 = vector.extract_strided_slice %10 {offsets = [0, 192], sizes = [16, 64], strides = [1, 1]} : vector<16x512xbf16> to vector<16x64xbf16>
    %c0_31 = arith.constant 0 : index
    %c192 = arith.constant 192 : index
    %66 = vector.load %arg8[%c0_31, %c192] : memref<16x1024xbf16, #tpu.memory_space<vmem>>, vector<16x64xbf16>
    %c0_32 = arith.constant 0 : index
    %c704 = arith.constant 704 : index
    %67 = vector.load %arg8[%c0_32, %c704] : memref<16x1024xbf16, #tpu.memory_space<vmem>>, vector<16x64xbf16>
    "tpu.trace_start"() <{level = 10 : i32, message = "qd,kd->qk"}> : () -> ()
    %cst_33 = arith.constant dense<0.000000e+00> : vector<16x16xf32>
    %68 = tpu.matmul %65, %66, %cst_33 {dimension_numbers = #tpu.dot_dimension_numbers<[1], [1], [0], [0], [0, 0, 1, 0], [], []>} : vector<16x64xbf16>, vector<16x64xbf16>, vector<16x16xf32> -> vector<16x16xf32>
    "tpu.trace_stop"() : () -> ()
    %cst_34 = arith.constant dense<0xFF800000> : vector<16xf32>
    %69 = vector.multi_reduction <maximumf>, %68, %cst_34 [1] : vector<16x16xf32> to vector<16xf32>
    %70 = vector.shape_cast %69 : vector<16xf32> to vector<16x1xf32>
    %71 = vector.broadcast %70 : vector<16x1xf32> to vector<16x16xf32>
    %72 = arith.subf %68, %71 : vector<16x16xf32>
    %73 = math.exp %72 : vector<16x16xf32>
    %cst_35 = arith.constant dense<0.000000e+00> : vector<16xf32>
    %74 = vector.multi_reduction <add>, %73, %cst_35 [1] : vector<16x16xf32> to vector<16xf32>
    %75 = vector.shape_cast %74 : vector<16xf32> to vector<16x1xf32>
    %76 = arith.truncf %73 : vector<16x16xf32> to vector<16x16xbf16>
    %cst_36 = arith.constant dense<0.000000e+00> : vector<16x64xf32>
    %77 = tpu.matmul %76, %67, %cst_36 {dimension_numbers = #tpu.dot_dimension_numbers<[1], [0], [0], [1], [0, 0, 1, 1], [], []>} : vector<16x16xbf16>, vector<16x64xbf16>, vector<16x64xf32> -> vector<16x64xf32>
    %78 = tpu.reciprocal %75 {approx = true} : vector<16x1xf32> -> vector<16x1xf32>
    %79 = vector.broadcast %78 : vector<16x1xf32> to vector<16x64xf32>
    %80 = arith.mulf %77, %79 : vector<16x64xf32>
    %81 = arith.truncf %80 : vector<16x64xf32> to vector<16x64xbf16>
    %c0_37 = arith.constant 0 : index
    %c192_38 = arith.constant 192 : index
    %82 = vector.load %arg9[%c0_37, %c192_38] : memref<16x512xbf16, #tpu.memory_space<vmem>>, vector<16x64xbf16>
    tpu.vector_store %arg9[%c0_37, %c192_38], %81 {strides = array<i32>} : memref<16x512xbf16, #tpu.memory_space<vmem>>, vector<16x64xbf16>,
    %83 = vector.extract_strided_slice %10 {offsets = [0, 256], sizes = [16, 64], strides = [1, 1]} : vector<16x512xbf16> to vector<16x64xbf16>
    %c0_39 = arith.constant 0 : index
    %c256 = arith.constant 256 : index
    %84 = vector.load %arg8[%c0_39, %c256] : memref<16x1024xbf16, #tpu.memory_space<vmem>>, vector<16x64xbf16>
    %c0_40 = arith.constant 0 : index
    %c768 = arith.constant 768 : index
    %85 = vector.load %arg8[%c0_40, %c768] : memref<16x1024xbf16, #tpu.memory_space<vmem>>, vector<16x64xbf16>
    "tpu.trace_start"() <{level = 10 : i32, message = "qd,kd->qk"}> : () -> ()
    %cst_41 = arith.constant dense<0.000000e+00> : vector<16x16xf32>
    %86 = tpu.matmul %83, %84, %cst_41 {dimension_numbers = #tpu.dot_dimension_numbers<[1], [1], [0], [0], [0, 0, 1, 0], [], []>} : vector<16x64xbf16>, vector<16x64xbf16>, vector<16x16xf32> -> vector<16x16xf32>
    "tpu.trace_stop"() : () -> ()
    %cst_42 = arith.constant dense<0xFF800000> : vector<16xf32>
    %87 = vector.multi_reduction <maximumf>, %86, %cst_42 [1] : vector<16x16xf32> to vector<16xf32>
    %88 = vector.shape_cast %87 : vector<16xf32> to vector<16x1xf32>
    %89 = vector.broadcast %88 : vector<16x1xf32> to vector<16x16xf32>
    %90 = arith.subf %86, %89 : vector<16x16xf32>
    %91 = math.exp %90 : vector<16x16xf32>
    %cst_43 = arith.constant dense<0.000000e+00> : vector<16xf32>
    %92 = vector.multi_reduction <add>, %91, %cst_43 [1] : vector<16x16xf32> to vector<16xf32>
    %93 = vector.shape_cast %92 : vector<16xf32> to vector<16x1xf32>
    %94 = arith.truncf %91 : vector<16x16xf32> to vector<16x16xbf16>
    %cst_44 = arith.constant dense<0.000000e+00> : vector<16x64xf32>
    %95 = tpu.matmul %94, %85, %cst_44 {dimension_numbers = #tpu.dot_dimension_numbers<[1], [0], [0], [1], [0, 0, 1, 1], [], []>} : vector<16x16xbf16>, vector<16x64xbf16>, vector<16x64xf32> -> vector<16x64xf32>
    %96 = tpu.reciprocal %93 {approx = true} : vector<16x1xf32> -> vector<16x1xf32>
    %97 = vector.broadcast %96 : vector<16x1xf32> to vector<16x64xf32>
    %98 = arith.mulf %95, %97 : vector<16x64xf32>
    %99 = arith.truncf %98 : vector<16x64xf32> to vector<16x64xbf16>
    %c0_45 = arith.constant 0 : index
    %c256_46 = arith.constant 256 : index
    %100 = vector.load %arg9[%c0_45, %c256_46] : memref<16x512xbf16, #tpu.memory_space<vmem>>, vector<16x64xbf16>
    tpu.vector_store %arg9[%c0_45, %c256_46], %99 {strides = array<i32>} : memref<16x512xbf16, #tpu.memory_space<vmem>>, vector<16x64xbf16>,
    %101 = vector.extract_strided_slice %10 {offsets = [0, 320], sizes = [16, 64], strides = [1, 1]} : vector<16x512xbf16> to vector<16x64xbf16>
    %c0_47 = arith.constant 0 : index
    %c320 = arith.constant 320 : index
    %102 = vector.load %arg8[%c0_47, %c320] : memref<16x1024xbf16, #tpu.memory_space<vmem>>, vector<16x64xbf16>
    %c0_48 = arith.constant 0 : index
    %c832 = arith.constant 832 : index
    %103 = vector.load %arg8[%c0_48, %c832] : memref<16x1024xbf16, #tpu.memory_space<vmem>>, vector<16x64xbf16>
    "tpu.trace_start"() <{level = 10 : i32, message = "qd,kd->qk"}> : () -> ()
    %cst_49 = arith.constant dense<0.000000e+00> : vector<16x16xf32>
    %104 = tpu.matmul %101, %102, %cst_49 {dimension_numbers = #tpu.dot_dimension_numbers<[1], [1], [0], [0], [0, 0, 1, 0], [], []>} : vector<16x64xbf16>, vector<16x64xbf16>, vector<16x16xf32> -> vector<16x16xf32>
    "tpu.trace_stop"() : () -> ()
    %cst_50 = arith.constant dense<0xFF800000> : vector<16xf32>
    %105 = vector.multi_reduction <maximumf>, %104, %cst_50 [1] : vector<16x16xf32> to vector<16xf32>
    %106 = vector.shape_cast %105 : vector<16xf32> to vector<16x1xf32>
    %107 = vector.broadcast %106 : vector<16x1xf32> to vector<16x16xf32>
    %108 = arith.subf %104, %107 : vector<16x16xf32>
    %109 = math.exp %108 : vector<16x16xf32>
    %cst_51 = arith.constant dense<0.000000e+00> : vector<16xf32>
    %110 = vector.multi_reduction <add>, %109, %cst_51 [1] : vector<16x16xf32> to vector<16xf32>
    %111 = vector.shape_cast %110 : vector<16xf32> to vector<16x1xf32>
    %112 = arith.truncf %109 : vector<16x16xf32> to vector<16x16xbf16>
    %cst_52 = arith.constant dense<0.000000e+00> : vector<16x64xf32>
    %113 = tpu.matmul %112, %103, %cst_52 {dimension_numbers = #tpu.dot_dimension_numbers<[1], [0], [0], [1], [0, 0, 1, 1], [], []>} : vector<16x16xbf16>, vector<16x64xbf16>, vector<16x64xf32> -> vector<16x64xf32>
    %114 = tpu.reciprocal %111 {approx = true} : vector<16x1xf32> -> vector<16x1xf32>
    %115 = vector.broadcast %114 : vector<16x1xf32> to vector<16x64xf32>
    %116 = arith.mulf %113, %115 : vector<16x64xf32>
    %117 = arith.truncf %116 : vector<16x64xf32> to vector<16x64xbf16>
    %c0_53 = arith.constant 0 : index
    %c320_54 = arith.constant 320 : index
    %118 = vector.load %arg9[%c0_53, %c320_54] : memref<16x512xbf16, #tpu.memory_space<vmem>>, vector<16x64xbf16>
    tpu.vector_store %arg9[%c0_53, %c320_54], %117 {strides = array<i32>} : memref<16x512xbf16, #tpu.memory_space<vmem>>, vector<16x64xbf16>,
    %119 = vector.extract_strided_slice %10 {offsets = [0, 384], sizes = [16, 64], strides = [1, 1]} : vector<16x512xbf16> to vector<16x64xbf16>
    %c0_55 = arith.constant 0 : index
    %c384 = arith.constant 384 : index
    %120 = vector.load %arg8[%c0_55, %c384] : memref<16x1024xbf16, #tpu.memory_space<vmem>>, vector<16x64xbf16>
    %c0_56 = arith.constant 0 : index
    %c896 = arith.constant 896 : index
    %121 = vector.load %arg8[%c0_56, %c896] : memref<16x1024xbf16, #tpu.memory_space<vmem>>, vector<16x64xbf16>
    "tpu.trace_start"() <{level = 10 : i32, message = "qd,kd->qk"}> : () -> ()
    %cst_57 = arith.constant dense<0.000000e+00> : vector<16x16xf32>
    %122 = tpu.matmul %119, %120, %cst_57 {dimension_numbers = #tpu.dot_dimension_numbers<[1], [1], [0], [0], [0, 0, 1, 0], [], []>} : vector<16x64xbf16>, vector<16x64xbf16>, vector<16x16xf32> -> vector<16x16xf32>
    "tpu.trace_stop"() : () -> ()
    %cst_58 = arith.constant dense<0xFF800000> : vector<16xf32>
    %123 = vector.multi_reduction <maximumf>, %122, %cst_58 [1] : vector<16x16xf32> to vector<16xf32>
    %124 = vector.shape_cast %123 : vector<16xf32> to vector<16x1xf32>
    %125 = vector.broadcast %124 : vector<16x1xf32> to vector<16x16xf32>
    %126 = arith.subf %122, %125 : vector<16x16xf32>
    %127 = math.exp %126 : vector<16x16xf32>
    %cst_59 = arith.constant dense<0.000000e+00> : vector<16xf32>
    %128 = vector.multi_reduction <add>, %127, %cst_59 [1] : vector<16x16xf32> to vector<16xf32>
    %129 = vector.shape_cast %128 : vector<16xf32> to vector<16x1xf32>
    %130 = arith.truncf %127 : vector<16x16xf32> to vector<16x16xbf16>
    %cst_60 = arith.constant dense<0.000000e+00> : vector<16x64xf32>
    %131 = tpu.matmul %130, %121, %cst_60 {dimension_numbers = #tpu.dot_dimension_numbers<[1], [0], [0], [1], [0, 0, 1, 1], [], []>} : vector<16x16xbf16>, vector<16x64xbf16>, vector<16x64xf32> -> vector<16x64xf32>
    %132 = tpu.reciprocal %129 {approx = true} : vector<16x1xf32> -> vector<16x1xf32>
    %133 = vector.broadcast %132 : vector<16x1xf32> to vector<16x64xf32>
    %134 = arith.mulf %131, %133 : vector<16x64xf32>
    %135 = arith.truncf %134 : vector<16x64xf32> to vector<16x64xbf16>
    %c0_61 = arith.constant 0 : index
    %c384_62 = arith.constant 384 : index
    %136 = vector.load %arg9[%c0_61, %c384_62] : memref<16x512xbf16, #tpu.memory_space<vmem>>, vector<16x64xbf16>
    tpu.vector_store %arg9[%c0_61, %c384_62], %135 {strides = array<i32>} : memref<16x512xbf16, #tpu.memory_space<vmem>>, vector<16x64xbf16>,
    %137 = vector.extract_strided_slice %10 {offsets = [0, 448], sizes = [16, 64], strides = [1, 1]} : vector<16x512xbf16> to vector<16x64xbf16>
    %c0_63 = arith.constant 0 : index
    %c448 = arith.constant 448 : index
    %138 = vector.load %arg8[%c0_63, %c448] : memref<16x1024xbf16, #tpu.memory_space<vmem>>, vector<16x64xbf16>
    %c0_64 = arith.constant 0 : index
    %c960 = arith.constant 960 : index
    %139 = vector.load %arg8[%c0_64, %c960] : memref<16x1024xbf16, #tpu.memory_space<vmem>>, vector<16x64xbf16>
    "tpu.trace_start"() <{level = 10 : i32, message = "qd,kd->qk"}> : () -> ()
    %cst_65 = arith.constant dense<0.000000e+00> : vector<16x16xf32>
    %140 = tpu.matmul %137, %138, %cst_65 {dimension_numbers = #tpu.dot_dimension_numbers<[1], [1], [0], [0], [0, 0, 1, 0], [], []>} : vector<16x64xbf16>, vector<16x64xbf16>, vector<16x16xf32> -> vector<16x16xf32>
    "tpu.trace_stop"() : () -> ()
    %cst_66 = arith.constant dense<0xFF800000> : vector<16xf32>
    %141 = vector.multi_reduction <maximumf>, %140, %cst_66 [1] : vector<16x16xf32> to vector<16xf32>
    %142 = vector.shape_cast %141 : vector<16xf32> to vector<16x1xf32>
    %143 = vector.broadcast %142 : vector<16x1xf32> to vector<16x16xf32>
    %144 = arith.subf %140, %143 : vector<16x16xf32>
    %145 = math.exp %144 : vector<16x16xf32>
    %cst_67 = arith.constant dense<0.000000e+00> : vector<16xf32>
    %146 = vector.multi_reduction <add>, %145, %cst_67 [1] : vector<16x16xf32> to vector<16xf32>
    %147 = vector.shape_cast %146 : vector<16xf32> to vector<16x1xf32>
    %148 = arith.truncf %145 : vector<16x16xf32> to vector<16x16xbf16>
    %cst_68 = arith.constant dense<0.000000e+00> : vector<16x64xf32>
    %149 = tpu.matmul %148, %139, %cst_68 {dimension_numbers = #tpu.dot_dimension_numbers<[1], [0], [0], [1], [0, 0, 1, 1], [], []>} : vector<16x16xbf16>, vector<16x64xbf16>, vector<16x64xf32> -> vector<16x64xf32>
    %150 = tpu.reciprocal %147 {approx = true} : vector<16x1xf32> -> vector<16x1xf32>
    %151 = vector.broadcast %150 : vector<16x1xf32> to vector<16x64xf32>
    %152 = arith.mulf %149, %151 : vector<16x64xf32>
    %153 = arith.truncf %152 : vector<16x64xf32> to vector<16x64xbf16>
    %c0_69 = arith.constant 0 : index
    %c448_70 = arith.constant 448 : index
    %154 = vector.load %arg9[%c0_69, %c448_70] : memref<16x512xbf16, #tpu.memory_space<vmem>>, vector<16x64xbf16>
    tpu.vector_store %arg9[%c0_69, %c448_70], %153 {strides = array<i32>} : memref<16x512xbf16, #tpu.memory_space<vmem>>, vector<16x64xbf16>,
    %c0_71 = arith.constant 0 : index
    %c0_72 = arith.constant 0 : index
    %155 = vector.load %arg9[%c0_71, %c0_72] : memref<16x512xbf16, #tpu.memory_space<vmem>>, vector<16x512xbf16>
    %c0_73 = arith.constant 0 : index
    %c0_74 = arith.constant 0 : index
    %156 = vector.load %arg5[%c0_73, %c0_74] : memref<512x128xbf16, #tpu.memory_space<vmem>>, vector<512x128xbf16>
    %cst_75 = arith.constant dense<0.000000e+00> : vector<16x128xf32>
    %157 = tpu.matmul %155, %156, %cst_75 {dimension_numbers = #tpu.dot_dimension_numbers<[1], [0], [0], [1], [0, 0, 1, 1], [], []>} : vector<16x512xbf16>, vector<512x128xbf16>, vector<16x128xf32> -> vector<16x128xf32>
    %c0_76 = arith.constant 0 : index
    %c0_77 = arith.constant 0 : index
    %158 = vector.load %arg6[%c0_76, %c0_77] : memref<1x128xf32, #tpu.memory_space<vmem>>, vector<1x128xf32>
    %159 = vector.broadcast %158 : vector<1x128xf32> to vector<16x128xf32>
    %160 = arith.addf %157, %159 : vector<16x128xf32>
    %c0_78 = arith.constant 0 : index
    %c0_79 = arith.constant 0 : index
    %c0_80 = arith.constant 0 : index
    %161 = vector.load %arg7[%c0_78, %c0_79, %c0_80] : memref<1x16x128xf32, #tpu.memory_space<vmem>>, vector<1x16x128xf32>
    %162 = vector.shape_cast %161 : vector<1x16x128xf32> to vector<16x128xf32>
    %163 = vector.shape_cast %160 : vector<16x128xf32> to vector<1x16x128xf32>
    tpu.vector_store %arg7[%c0_78, %c0_79, %c0_80], %163 {strides = array<i32>} : memref<1x16x128xf32, #tpu.memory_space<vmem>>, vector<1x16x128xf32>,
    return
  }
  func.func @transform_0(%arg0: i32, %arg1: i32) -> (i32, i32, i32) {
    %c0_i32 = arith.constant 0 : i32
    %c0_i32_0 = arith.constant 0 : i32
    %c0_i32_1 = arith.constant 0 : i32
    return %arg0, %c0_i32, %c0_i32_0 : i32, i32, i32
  }
  func.func @transform_1(%arg0: i32, %arg1: i32) -> (i32, i32) {
    %c0_i32 = arith.constant 0 : i32
    %c0_i32_0 = arith.constant 0 : i32
    %c0_i32_1 = arith.constant 0 : i32
    return %c0_i32, %c0_i32_0 : i32, i32
  }
  func.func @transform_2(%arg0: i32, %arg1: i32) -> (i32, i32) {
    %c0_i32 = arith.constant 0 : i32
    %c0_i32_0 = arith.constant 0 : i32
    %c0_i32_1 = arith.constant 0 : i32
    return %c0_i32, %c0_i32_0 : i32, i32
  }
  func.func @transform_3(%arg0: i32, %arg1: i32) -> (i32, i32) {
    %c0_i32 = arith.constant 0 : i32
    %c0_i32_0 = arith.constant 0 : i32
    %c0_i32_1 = arith.constant 0 : i32
    return %c0_i32, %c0_i32_0 : i32, i32
  }
  func.func @transform_4(%arg0: i32, %arg1: i32) -> (i32, i32) {
    %c0_i32 = arith.constant 0 : i32
    %c0_i32_0 = arith.constant 0 : i32
    %c0_i32_1 = arith.constant 0 : i32
    return %c0_i32, %c0_i32_0 : i32, i32
  }
  func.func @transform_5(%arg0: i32, %arg1: i32) -> (i32, i32, i32) {
    %c0_i32 = arith.constant 0 : i32
    %c0_i32_0 = arith.constant 0 : i32
    return %arg0, %arg1, %c0_i32 : i32, i32, i32
  }
}

</mosaic_0001>

<llo_original>
// kernel: attention.1
$region0: #{attention.1}
  #allocation0 [shape = 'u32[]', space=smem, size = 0x4, offset = 0x4, fixed_abs, tag = 'smem constant byte address 0x4 - core index']
  #allocation1 [shape = 'u32[144,128]{1,0:T(1,128)}', space=vmem, size = 0x12000, scoped, tag = 'internal scratch']
  #allocation2 [shape = 'bf16[16,1024]{1,0:T(8,128)(2,1)}', space=vmem, size = 0x8000, scoped, tag = 'scratch operand']
  #allocation3 [shape = 'bf16[16,512]{1,0:T(8,128)(2,1)}', space=vmem, size = 0x4000, scoped, tag = 'scratch operand']
  %s0 = inlined_call_operand.vmem [shape: f32[2,16,128], index: 0, kind: input, shape index: {}]
  %s1 = inlined_call_operand.vmem [shape: bf16[128,512], index: 1, kind: input, shape index: {}]
  %s2 = inlined_call_operand.vmem [shape: bf16[128,1024], index: 2, kind: input, shape index: {}]
  %s3 = inlined_call_operand.vmem [shape: bf16[512,128], index: 3, kind: input, shape index: {}]
  %s4 = inlined_call_operand.vmem [shape: f32[1,128], index: 4, kind: input, shape index: {}]
  %s5 = inlined_call_operand.hbm [shape: f32[2,16,128], index: 5, kind: output, shape index: {}]
  %s6 = sld [smem:[#allocation0]]
  $region57: #{attention.1} parent=0
    _
  %s8 = ssub.s32 1, %s6
  %s9 = scalar_select 0, %s8, %s6
  $region1: #{attention.1} parent=0
    #allocation4 [shape = 'u8[16384]{0}', space=vmem, size = 0x4000, scoped, tag = 'output window, operand 0']
    #allocation5 [shape = 's32[2]{0}', space=sflag, size = 0x8, scoped, tag = 'scoped memory for attention.1']
    %10 = vsyncpa [#allocation5], 0
    %s11 = scalar_lea.sflag [#allocation5], 1
    %12 = vsyncpa %s11, 0
    loop: start=0, step=1, limit=4
    $region2: #{attention.1} parent=1 // loop_pre_header
      _
    $region3: #{attention.1} parent=1 // loop_header
      %s14 = sphi 0, %s18
      %p15 = scmp.ge.s32.totalorder %s14, 4
      %s21 = sphi 0, %s33
      %s22 = sphi 0, %s29
      %s23 = sphi 0, %s21
      %s24 = sphi 0, %s22
      %s25 = sphi 0, %s23
      %s26 = sphi 0, %s24
      %s36 = sphi 0, %s38
      %s39 = sphi 0, %s36
      %s40 = sphi 0, %s39
      %s56 = sphi 0, %s40
      %s60 = sphi 0, %s60
      %s62 = sphi 0, %s60
      %s63 = sphi 0, %s62
      %s77 = sphi 0, %s63
      %s81 = sphi 0, %s81
      %s83 = sphi 0, %s81
      %s84 = sphi 0, %s83
      %s98 = sphi 0, %s84
      %s102 = sphi 0, %s102
      %s104 = sphi 0, %s102
      %s105 = sphi 0, %s104
      %s119 = sphi 0, %s105
      %s123 = sphi 0, %s123
      %s125 = sphi 0, %s123
      %s126 = sphi 0, %s125
      %s140 = sphi 0, %s126
      %s148 = sphi 0, %s150
      %s151 = sphi 0, %s148
      %s152 = sphi 0, %s151
      %s168 = sphi 0, %s152
    $region4: #{attention.1} parent=1 // loop_header_branch
      %17 = sbr.rel (%p15) target = $region8
    $region5: #{attention.1} parent=1 // loop_body
      %s19 = ssub.s32 %s14, 1
      %s20 = ssub.s32 %s14, 2
      %s27 = sadd.s32 1, %s22
      %p28 = scmp.ge.s32.totalorder %s27, 1
      %s29 = scalar_select %p28, 0, %s27
      %s30 = sadd.s32 1, %s21
      %s31 = scalar_select %p28, %s30, %s21
      %p32 = scmp.ge.s32.totalorder %s31, 2
      %s33 = scalar_select %p32, 0, %s31
      %s34 = ssub.s32 %s21, %s33
      %p35 = scmp.eq.s32.totalorder %s34, 0
      %s37 = sadd.s32 %s36, 1
      %s38 = scalar_select %p35, %s36, %s37
      %p41 = pneg %p35
      %p42 = scmp.eq.s32.totalorder %s14, 1
      %p43 = por %p41, %p42
      %p44 = scmp.ne.s32.totalorder %s36, %s39
      %p45 = scmp.eq.s32.totalorder %s14, 0
      %p46 = por %p44, %p45
      %p47 = scmp.ne.s32.totalorder %s36, %s39
      %p48 = scmp.eq.s32.totalorder %s19, 1
      %p49 = por %p47, %p48
      %p50 = scmp.ne.s32.totalorder %s39, %s40
      %p51 = scmp.eq.s32.totalorder %s19, 0
      %p52 = por %p50, %p51
      %p53 = scmp.ne.s32.totalorder %s39, %s40
      %p54 = scmp.eq.s32.totalorder %s20, 1
      %p55 = por %p53, %p54
      %p57 = scmp.ne.s32.totalorder %s40, %s56
      %p58 = scmp.eq.s32.totalorder %s20, 0
      %p59 = por %p57, %p58
      %s61 = sadd.s32 %s60, 1
      %p64 = scmp.eq.s32.totalorder %s14, 1
      %p65 = scmp.ne.s32.totalorder %s60, %s62
      %p66 = scmp.eq.s32.totalorder %s14, 0
      %p67 = por %p65, %p66
      %p68 = scmp.ne.s32.totalorder %s60, %s62
      %p69 = scmp.eq.s32.totalorder %s19, 1
      %p70 = por %p68, %p69
      %p71 = scmp.ne.s32.totalorder %s62, %s63
      %p72 = scmp.eq.s32.totalorder %s19, 0
      %p73 = por %p71, %p72
      %p74 = scmp.ne.s32.totalorder %s62, %s63
      %p75 = scmp.eq.s32.totalorder %s20, 1
      %p76 = por %p74, %p75
      %p78 = scmp.ne.s32.totalorder %s63, %s77
      %p79 = scmp.eq.s32.totalorder %s20, 0
      %p80 = por %p78, %p79
      %s82 = sadd.s32 %s81, 1
      %p85 = scmp.eq.s32.totalorder %s14, 1
      %p86 = scmp.ne.s32.totalorder %s81, %s83
      %p87 = scmp.eq.s32.totalorder %s14, 0
      %p88 = por %p86, %p87
      %p89 = scmp.ne.s32.totalorder %s81, %s83
      %p90 = scmp.eq.s32.totalorder %s19, 1
      %p91 = por %p89, %p90
      %p92 = scmp.ne.s32.totalorder %s83, %s84
      %p93 = scmp.eq.s32.totalorder %s19, 0
      %p94 = por %p92, %p93
      %p95 = scmp.ne.s32.totalorder %s83, %s84
      %p96 = scmp.eq.s32.totalorder %s20, 1
      %p97 = por %p95, %p96
      %p99 = scmp.ne.s32.totalorder %s84, %s98
      %p100 = scmp.eq.s32.totalorder %s20, 0
      %p101 = por %p99, %p100
      %s103 = sadd.s32 %s102, 1
      %p106 = scmp.eq.s32.totalorder %s14, 1
      %p107 = scmp.ne.s32.totalorder %s102, %s104
      %p108 = scmp.eq.s32.totalorder %s14, 0
      %p109 = por %p107, %p108
      %p110 = scmp.ne.s32.totalorder %s102, %s104
      %p111 = scmp.eq.s32.totalorder %s19, 1
      %p112 = por %p110, %p111
      %p113 = scmp.ne.s32.totalorder %s104, %s105
      %p114 = scmp.eq.s32.totalorder %s19, 0
      %p115 = por %p113, %p114
      %p116 = scmp.ne.s32.totalorder %s104, %s105
      %p117 = scmp.eq.s32.totalorder %s20, 1
      %p118 = por %p116, %p117
      %p120 = scmp.ne.s32.totalorder %s105, %s119
      %p121 = scmp.eq.s32.totalorder %s20, 0
      %p122 = por %p120, %p121
      %s124 = sadd.s32 %s123, 1
      %p127 = scmp.eq.s32.totalorder %s14, 1
      %p128 = scmp.ne.s32.totalorder %s123, %s125
      %p129 = scmp.eq.s32.totalorder %s14, 0
      %p130 = por %p128, %p129
      %p131 = scmp.ne.s32.totalorder %s123, %s125
      %p132 = scmp.eq.s32.totalorder %s19, 1
      %p133 = por %p131, %p132
      %p134 = scmp.ne.s32.totalorder %s125, %s126
      %p135 = scmp.eq.s32.totalorder %s19, 0
      %p136 = por %p134, %p135
      %p137 = scmp.ne.s32.totalorder %s125, %s126
      %p138 = scmp.eq.s32.totalorder %s20, 1
      %p139 = por %p137, %p138
      %p141 = scmp.ne.s32.totalorder %s126, %s140
      %p142 = scmp.eq.s32.totalorder %s20, 0
      %p143 = por %p141, %p142
      %s144 = ssub.s32 %s21, %s33
      %s145 = ssub.s32 %s22, %s29
      %s146 = sor.u32 %s144, %s145
      %p147 = scmp.eq.s32.totalorder %s146, 0
      %s149 = sadd.s32 %s148, 1
      %s150 = scalar_select %p147, %s148, %s149
      %p153 = pneg %p147
      %p154 = scmp.eq.s32.totalorder %s14, 1
      %p155 = por %p153, %p154
      %p156 = scmp.ne.s32.totalorder %s148, %s151
      %p157 = scmp.eq.s32.totalorder %s14, 0
      %p158 = por %p156, %p157
      %p159 = scmp.ne.s32.totalorder %s148, %s151
      %p160 = scmp.eq.s32.totalorder %s19, 1
      %p161 = por %p159, %p160
      %p162 = scmp.ne.s32.totalorder %s151, %s152
      %p163 = scmp.eq.s32.totalorder %s19, 0
      %p164 = por %p162, %p163
      %p165 = scmp.ne.s32.totalorder %s151, %s152
      %p166 = scmp.eq.s32.totalorder %s20, 1
      %p167 = por %p165, %p166
      %p169 = scmp.ne.s32.totalorder %s152, %s168
      %p170 = scmp.eq.s32.totalorder %s20, 0
      %p171 = por %p169, %p170
      %p172 = scmp.le.s32.totalorder 1, %s14
      %p173 = scmp.lt.s32.totalorder %s14, 3
      %p174 = pnand %p172, %p173
      %p175 = pneg %p174
      // Predicated region
      $region9: #{attention.1} parent=5 // pred_check
        _
      $region10: #{attention.1} parent=5 // pred_check_branch
        %177 = sbr.rel (%p174) target = $region12
      $region11: #{attention.1} parent=5 // pred_region
        %s178 = ssub.s32 %s14, 1
        // Predicated region
        $region13: #{attention.1} parent=11 // pred_check
          %p179 = pneg %p73
        $region14: #{attention.1} parent=11 // pred_check_branch
          %181 = sbr.rel (%p179) target = $region16
        $region15: #{attention.1} parent=11 // pred_region
          _
        $region16: #{attention.1} parent=11 // pred_fallthru
          _
        // Predicated region
        $region17: #{attention.1} parent=11 // pred_check
          %p182 = pneg %p94
        $region18: #{attention.1} parent=11 // pred_check_branch
          %184 = sbr.rel (%p182) target = $region20
        $region19: #{attention.1} parent=11 // pred_region
          _
        $region20: #{attention.1} parent=11 // pred_fallthru
          _
        // Predicated region
        $region21: #{attention.1} parent=11 // pred_check
          %p185 = pneg %p115
        $region22: #{attention.1} parent=11 // pred_check_branch
          %187 = sbr.rel (%p185) target = $region24
        $region23: #{attention.1} parent=11 // pred_region
          _
        $region24: #{attention.1} parent=11 // pred_fallthru
          _
        // Predicated region
        $region25: #{attention.1} parent=11 // pred_check
          %p188 = pneg %p136
        $region26: #{attention.1} parent=11 // pred_check_branch
          %190 = sbr.rel (%p188) target = $region28
        $region27: #{attention.1} parent=11 // pred_region
          _
        $region28: #{attention.1} parent=11 // pred_fallthru
          _
      $region12: #{attention.1} parent=5 // pred_fallthru
        _
      %p191 = scmp.lt.s32.totalorder %s14, 2
      // Predicated region
      $region29: #{attention.1} parent=5 // pred_check
        %p192 = pneg %p191
      $region30: #{attention.1} parent=5 // pred_check_branch
        %194 = sbr.rel (%p192) target = $region32
      $region31: #{attention.1} parent=5 // pred_region
        // Predicated region
        $region33: #{attention.1} parent=31 // pred_check
          %p195 = pneg %p46
        $region34: #{attention.1} parent=31 // pred_check_branch
          %197 = sbr.rel (%p195) target = $region36
        $region35: #{attention.1} parent=31 // pred_region
          %p198 = scmp.lt.s32.totalorder %s21, 1
          %s199 = scalar_select %p198, %s21, 1
          %s200 = smul.addr %s199, 2
          %s201 = smul.addr %s200, 8
          %s202 = scalar_lea.vmem %s0, %s201
        $region36: #{attention.1} parent=31 // pred_fallthru
          _
      $region32: #{attention.1} parent=5 // pred_fallthru
        _
      %p203 = scmp.le.s32.totalorder 1, %s14
      %p204 = scmp.lt.s32.totalorder %s14, 3
      %p205 = pnand %p203, %p204
      %p206 = pneg %p205
      // Predicated region
      $region37: #{attention.1} parent=5 // pred_check
        _
      $region38: #{attention.1} parent=5 // pred_check_branch
        %208 = sbr.rel (%p205) target = $region40
      $region39: #{attention.1} parent=5 // pred_region
        %s209 = ssub.s32 %s14, 1
        %p210 = scmp.lt.s32.totalorder %s23, 1
        %s211 = scalar_select %p210, %s23, 1
        %s212 = smul.addr %s211, 2
        %s213 = smul.addr %s212, 8
        %s214 = scalar_lea.vmem %s0, %s213
        %p215 = pneg %p52
        %p216 = pneg %p49
        %p217 = pneg %p73
        %p218 = pneg %p70
        %p219 = pneg %p94
        %p220 = pneg %p91
        %p221 = pneg %p115
        %p222 = pneg %p112
        %p223 = pneg %p136
        %p224 = pneg %p133
        %p225 = pneg %p164
        %p226 = pneg %p161
        %s227 = sand.u32 %s151, 1
        %s228 = scalar_lea.sflag [#allocation5], %s227
        %s229 = sand.u32 %s151, 1
        %s230 = smul.addr %s229, 16
        %s231 = scalar_lea.vmem [#allocation4], %s230
        %p232 = scmp.lt.s32.totalorder %s23, 1
        %s233 = scalar_select %p232, %s23, 1
        %s234 = smul.addr %s233, 2
        %s235 = smul.addr %s234, 8
        %s236 = scalar_lea.vmem %s0, %s235
        %s237 = smul.u32 2, %s24
        %p239 = scmp.eq.s32.totalorder %s24, 0
        // Predicated region
        $region41: #{attention.1} parent=39 // pred_check
          %p240 = pneg %p239
        $region42: #{attention.1} parent=39 // pred_check_branch
          %242 = sbr.rel (%p240) target = $region44
        $region43: #{attention.1} parent=39 // pred_region
          %v243 = vld [vmem:[%s236] sm:$0xff]
          %v244 = vld [vmem:[%s236 + $0x8] sm:$0xff]
          %v245 = vpack.c.bf16 %v244, %v243
          %v246 = vld [vmem:[%s2] sm:$0xff]
          %v247 = vld [vmem:[%s2 + $0x8] sm:$0xff]
          %v248 = vld [vmem:[%s2 + $0x10] sm:$0xff]
          %v249 = vld [vmem:[%s2 + $0x18] sm:$0xff]
          %v250 = vld [vmem:[%s2 + $0x20] sm:$0xff]
          %v251 = vld [vmem:[%s2 + $0x28] sm:$0xff]
          %v252 = vld [vmem:[%s2 + $0x30] sm:$0xff]
          %v253 = vld [vmem:[%s2 + $0x38] sm:$0xff]
          %v254 = vld [vmem:[%s2 + $0x40] sm:$0xff]
          %v255 = vld [vmem:[%s2 + $0x48] sm:$0xff]
          %v256 = vld [vmem:[%s2 + $0x50] sm:$0xff]
          %v257 = vld [vmem:[%s2 + $0x58] sm:$0xff]
          %v258 = vld [vmem:[%s2 + $0x60] sm:$0xff]
          %v259 = vld [vmem:[%s2 + $0x68] sm:$0xff]
          %v260 = vld [vmem:[%s2 + $0x70] sm:$0xff]
          %v261 = vld [vmem:[%s2 + $0x78] sm:$0xff]
          %v262 = vld [vmem:[%s2 + $0x80] sm:$0xff]
          %v263 = vld [vmem:[%s2 + $0x88] sm:$0xff]
          %v264 = vld [vmem:[%s2 + $0x90] sm:$0xff]
          %v265 = vld [vmem:[%s2 + $0x98] sm:$0xff]
          %v266 = vld [vmem:[%s2 + $0xa0] sm:$0xff]
          %v267 = vld [vmem:[%s2 + $0xa8] sm:$0xff]
          %v268 = vld [vmem:[%s2 + $0xb0] sm:$0xff]
          %v269 = vld [vmem:[%s2 + $0xb8] sm:$0xff]
          %v270 = vld [vmem:[%s2 + $0xc0] sm:$0xff]
          %v271 = vld [vmem:[%s2 + $0xc8] sm:$0xff]
          %v272 = vld [vmem:[%s2 + $0xd0] sm:$0xff]
          %v273 = vld [vmem:[%s2 + $0xd8] sm:$0xff]
          %v274 = vld [vmem:[%s2 + $0xe0] sm:$0xff]
          %v275 = vld [vmem:[%s2 + $0xe8] sm:$0xff]
          %v276 = vld [vmem:[%s2 + $0xf0] sm:$0xff]
          %v277 = vld [vmem:[%s2 + $0xf8] sm:$0xff]
          %v278 = vld [vmem:[%s2 + $0x100] sm:$0xff]
          %v279 = vld [vmem:[%s2 + $0x108] sm:$0xff]
          %v280 = vld [vmem:[%s2 + $0x110] sm:$0xff]
          %v281 = vld [vmem:[%s2 + $0x118] sm:$0xff]
          %v282 = vld [vmem:[%s2 + $0x120] sm:$0xff]
          %v283 = vld [vmem:[%s2 + $0x128] sm:$0xff]
          %v284 = vld [vmem:[%s2 + $0x130] sm:$0xff]
          %v285 = vld [vmem:[%s2 + $0x138] sm:$0xff]
          %v286 = vld [vmem:[%s2 + $0x140] sm:$0xff]
          %v287 = vld [vmem:[%s2 + $0x148] sm:$0xff]
          %v288 = vld [vmem:[%s2 + $0x150] sm:$0xff]
          %v289 = vld [vmem:[%s2 + $0x158] sm:$0xff]
          %v290 = vld [vmem:[%s2 + $0x160] sm:$0xff]
          %v291 = vld [vmem:[%s2 + $0x168] sm:$0xff]
          %v292 = vld [vmem:[%s2 + $0x170] sm:$0xff]
          %v293 = vld [vmem:[%s2 + $0x178] sm:$0xff]
          %v294 = vld [vmem:[%s2 + $0x180] sm:$0xff]
          %v295 = vld [vmem:[%s2 + $0x188] sm:$0xff]
          %v296 = vld [vmem:[%s2 + $0x190] sm:$0xff]
          %v297 = vld [vmem:[%s2 + $0x198] sm:$0xff]
          %v298 = vld [vmem:[%s2 + $0x1a0] sm:$0xff]
          %v299 = vld [vmem:[%s2 + $0x1a8] sm:$0xff]
          %v300 = vld [vmem:[%s2 + $0x1b0] sm:$0xff]
          %v301 = vld [vmem:[%s2 + $0x1b8] sm:$0xff]
          %v302 = vld [vmem:[%s2 + $0x1c0] sm:$0xff]
          %v303 = vld [vmem:[%s2 + $0x1c8] sm:$0xff]
          %v304 = vld [vmem:[%s2 + $0x1d0] sm:$0xff]
          %v305 = vld [vmem:[%s2 + $0x1d8] sm:$0xff]
          %v306 = vld [vmem:[%s2 + $0x1e0] sm:$0xff]
          %v307 = vld [vmem:[%s2 + $0x1e8] sm:$0xff]
          %v308 = vld [vmem:[%s2 + $0x1f0] sm:$0xff]
          %v309 = vld [vmem:[%s2 + $0x1f8] sm:$0xff]
          %v374 = vunpack.c.l.b16 %v246
          %v375 = vunpack.c.h.b16 %v246
          %v376 = vunpack.c.l.b16 %v247
          %v377 = vunpack.c.h.b16 %v247
          %v378 = vunpack.c.l.b16 %v248
          %v379 = vunpack.c.h.b16 %v248
          %v380 = vunpack.c.l.b16 %v249
          %v381 = vunpack.c.h.b16 %v249
          %v382 = vunpack.c.l.b16 %v250
          %v383 = vunpack.c.h.b16 %v250
          %v384 = vunpack.c.l.b16 %v251
          %v385 = vunpack.c.h.b16 %v251
          %v386 = vunpack.c.l.b16 %v252
          %v387 = vunpack.c.h.b16 %v252
          %v388 = vunpack.c.l.b16 %v253
          %v389 = vunpack.c.h.b16 %v253
          %v390 = vunpack.c.l.b16 %v254
          %v391 = vunpack.c.h.b16 %v254
          %v392 = vunpack.c.l.b16 %v255
          %v393 = vunpack.c.h.b16 %v255
          %v394 = vunpack.c.l.b16 %v256
          %v395 = vunpack.c.h.b16 %v256
          %v396 = vunpack.c.l.b16 %v257
          %v397 = vunpack.c.h.b16 %v257
          %v398 = vunpack.c.l.b16 %v258
          %v399 = vunpack.c.h.b16 %v258
          %v400 = vunpack.c.l.b16 %v259
          %v401 = vunpack.c.h.b16 %v259
          %v402 = vunpack.c.l.b16 %v260
          %v403 = vunpack.c.h.b16 %v260
          %v404 = vunpack.c.l.b16 %v261
          %v405 = vunpack.c.h.b16 %v261
          %v406 = vunpack.c.l.b16 %v262
          %v407 = vunpack.c.h.b16 %v262
          %v408 = vunpack.c.l.b16 %v263
          %v409 = vunpack.c.h.b16 %v263
          %v410 = vunpack.c.l.b16 %v264
          %v411 = vunpack.c.h.b16 %v264
          %v412 = vunpack.c.l.b16 %v265
          %v413 = vunpack.c.h.b16 %v265
          %v414 = vunpack.c.l.b16 %v266
          %v415 = vunpack.c.h.b16 %v266
          %v416 = vunpack.c.l.b16 %v267
          %v417 = vunpack.c.h.b16 %v267
          %v418 = vunpack.c.l.b16 %v268
          %v419 = vunpack.c.h.b16 %v268
          %v420 = vunpack.c.l.b16 %v269
          %v421 = vunpack.c.h.b16 %v269
          %v422 = vunpack.c.l.b16 %v270
          %v423 = vunpack.c.h.b16 %v270
          %v424 = vunpack.c.l.b16 %v271
          %v425 = vunpack.c.h.b16 %v271
          %v426 = vunpack.c.l.b16 %v272
          %v427 = vunpack.c.h.b16 %v272
          %v428 = vunpack.c.l.b16 %v273
          %v429 = vunpack.c.h.b16 %v273
          %v430 = vunpack.c.l.b16 %v274
          %v431 = vunpack.c.h.b16 %v274
          %v432 = vunpack.c.l.b16 %v275
          %v433 = vunpack.c.h.b16 %v275
          %v434 = vunpack.c.l.b16 %v276
          %v435 = vunpack.c.h.b16 %v276
          %v436 = vunpack.c.l.b16 %v277
          %v437 = vunpack.c.h.b16 %v277
          %v438 = vunpack.c.l.b16 %v278
          %v439 = vunpack.c.h.b16 %v278
          %v440 = vunpack.c.l.b16 %v279
          %v441 = vunpack.c.h.b16 %v279
          %v442 = vunpack.c.l.b16 %v280
          %v443 = vunpack.c.h.b16 %v280
          %v444 = vunpack.c.l.b16 %v281
          %v445 = vunpack.c.h.b16 %v281
          %v446 = vunpack.c.l.b16 %v282
          %v447 = vunpack.c.h.b16 %v282
          %v448 = vunpack.c.l.b16 %v283
          %v449 = vunpack.c.h.b16 %v283
          %v450 = vunpack.c.l.b16 %v284
          %v451 = vunpack.c.h.b16 %v284
          %v452 = vunpack.c.l.b16 %v285
          %v453 = vunpack.c.h.b16 %v285
          %v454 = vunpack.c.l.b16 %v286
          %v455 = vunpack.c.h.b16 %v286
          %v456 = vunpack.c.l.b16 %v287
          %v457 = vunpack.c.h.b16 %v287
          %v458 = vunpack.c.l.b16 %v288
          %v459 = vunpack.c.h.b16 %v288
          %v460 = vunpack.c.l.b16 %v289
          %v461 = vunpack.c.h.b16 %v289
          %v462 = vunpack.c.l.b16 %v290
          %v463 = vunpack.c.h.b16 %v290
          %v464 = vunpack.c.l.b16 %v291
          %v465 = vunpack.c.h.b16 %v291
          %v466 = vunpack.c.l.b16 %v292
          %v467 = vunpack.c.h.b16 %v292
          %v468 = vunpack.c.l.b16 %v293
          %v469 = vunpack.c.h.b16 %v293
          %v470 = vunpack.c.l.b16 %v294
          %v471 = vunpack.c.h.b16 %v294
          %v472 = vunpack.c.l.b16 %v295
          %v473 = vunpack.c.h.b16 %v295
          %v474 = vunpack.c.l.b16 %v296
          %v475 = vunpack.c.h.b16 %v296
          %v476 = vunpack.c.l.b16 %v297
          %v477 = vunpack.c.h.b16 %v297
          %v478 = vunpack.c.l.b16 %v298
          %v479 = vunpack.c.h.b16 %v298
          %v480 = vunpack.c.l.b16 %v299
          %v481 = vunpack.c.h.b16 %v299
          %v482 = vunpack.c.l.b16 %v300
          %v483 = vunpack.c.h.b16 %v300
          %v484 = vunpack.c.l.b16 %v301
          %v485 = vunpack.c.h.b16 %v301
          %v486 = vunpack.c.l.b16 %v302
          %v487 = vunpack.c.h.b16 %v302
          %v488 = vunpack.c.l.b16 %v303
          %v489 = vunpack.c.h.b16 %v303
          %v490 = vunpack.c.l.b16 %v304
          %v491 = vunpack.c.h.b16 %v304
          %v492 = vunpack.c.l.b16 %v305
          %v493 = vunpack.c.h.b16 %v305
          %v494 = vunpack.c.l.b16 %v306
          %v495 = vunpack.c.h.b16 %v306
          %v496 = vunpack.c.l.b16 %v307
          %v497 = vunpack.c.h.b16 %v307
          %v498 = vunpack.c.l.b16 %v308
          %v499 = vunpack.c.h.b16 %v308
          %v500 = vunpack.c.l.b16 %v309
          %v501 = vunpack.c.h.b16 %v309
          %v502 = vpack.c.b16 %v382, %v374
          %v503 = vpack.c.b16 %v383, %v375
          %v504 = vpack.c.b16 %v384, %v376
          %v505 = vpack.c.b16 %v385, %v377
          %v506 = vpack.c.b16 %v386, %v378
          %v507 = vpack.c.b16 %v387, %v379
          %v508 = vpack.c.b16 %v388, %v380
          %v509 = vpack.c.b16 %v389, %v381
          %v510 = vpack.c.b16 %v398, %v390
          %v511 = vpack.c.b16 %v399, %v391
          %v512 = vpack.c.b16 %v400, %v392
          %v513 = vpack.c.b16 %v401, %v393
          %v514 = vpack.c.b16 %v402, %v394
          %v515 = vpack.c.b16 %v403, %v395
          %v516 = vpack.c.b16 %v404, %v396
          %v517 = vpack.c.b16 %v405, %v397
          %v518 = vpack.c.b16 %v414, %v406
          %v519 = vpack.c.b16 %v415, %v407
          %v520 = vpack.c.b16 %v416, %v408
          %v521 = vpack.c.b16 %v417, %v409
          %v522 = vpack.c.b16 %v418, %v410
          %v523 = vpack.c.b16 %v419, %v411
          %v524 = vpack.c.b16 %v420, %v412
          %v525 = vpack.c.b16 %v421, %v413
          %v526 = vpack.c.b16 %v430, %v422
          %v527 = vpack.c.b16 %v431, %v423
          %v528 = vpack.c.b16 %v432, %v424
          %v529 = vpack.c.b16 %v433, %v425
          %v530 = vpack.c.b16 %v434, %v426
          %v531 = vpack.c.b16 %v435, %v427
          %v532 = vpack.c.b16 %v436, %v428
          %v533 = vpack.c.b16 %v437, %v429
          %v534 = vpack.c.b16 %v446, %v438
          %v535 = vpack.c.b16 %v447, %v439
          %v536 = vpack.c.b16 %v448, %v440
          %v537 = vpack.c.b16 %v449, %v441
          %v538 = vpack.c.b16 %v450, %v442
          %v539 = vpack.c.b16 %v451, %v443
          %v540 = vpack.c.b16 %v452, %v444
          %v541 = vpack.c.b16 %v453, %v445
          %v542 = vpack.c.b16 %v462, %v454
          %v543 = vpack.c.b16 %v463, %v455
          %v544 = vpack.c.b16 %v464, %v456
          %v545 = vpack.c.b16 %v465, %v457
          %v546 = vpack.c.b16 %v466, %v458
          %v547 = vpack.c.b16 %v467, %v459
          %v548 = vpack.c.b16 %v468, %v460
          %v549 = vpack.c.b16 %v469, %v461
          %v550 = vpack.c.b16 %v478, %v470
          %v551 = vpack.c.b16 %v479, %v471
          %v552 = vpack.c.b16 %v480, %v472
          %v553 = vpack.c.b16 %v481, %v473
          %v554 = vpack.c.b16 %v482, %v474
          %v555 = vpack.c.b16 %v483, %v475
          %v556 = vpack.c.b16 %v484, %v476
          %v557 = vpack.c.b16 %v485, %v477
          %v558 = vpack.c.b16 %v494, %v486
          %v559 = vpack.c.b16 %v495, %v487
          %v560 = vpack.c.b16 %v496, %v488
          %v561 = vpack.c.b16 %v497, %v489
          %v562 = vpack.c.b16 %v498, %v490
          %v563 = vpack.c.b16 %v499, %v491
          %v564 = vpack.c.b16 %v500, %v492
          %v565 = vpack.c.b16 %v501, %v493
          %630 = vmatprep.subr.bf16.mxu0 %v559
          %631 = vmatpush1.bf16.msra.mxu0 %v558
          %632 = vmatprep.subr.bf16.mxu0 %v551
          %633 = vmatpush1.bf16.msra.mxu0 %v550
          %634 = vmatprep.subr.bf16.mxu0 %v543
          %635 = vmatpush1.bf16.msra.mxu0 %v542
          %636 = vmatprep.subr.bf16.mxu0 %v535
          %637 = vmatpush1.bf16.msra.mxu0 %v534
          %638 = vmatprep.subr.bf16.mxu0 %v527
          %639 = vmatpush1.bf16.msra.mxu0 %v526
          %640 = vmatprep.subr.bf16.mxu0 %v519
          %641 = vmatpush1.bf16.msra.mxu0 %v518
          %642 = vmatprep.subr.bf16.mxu0 %v511
          %643 = vmatpush1.bf16.msra.mxu0 %v510
          %644 = vmatprep.subr.bf16.mxu0 %v503
          %645 = vmatpush1.bf16.msra.mxu0 %v502
          %646 = vmatprep.subr.bf16.mxu0 0
          %647 = vmatpush2.bf16.msra.mxu0 0
          %648 = vmatprep.subr.bf16.mxu0 0
          %649 = vmatpush2.bf16.msra.mxu0 0
          %650 = vmatprep.subr.bf16.mxu0 0
          %651 = vmatpush2.bf16.msra.mxu0 0
          %652 = vmatprep.subr.bf16.mxu0 0
          %653 = vmatpush2.bf16.msra.mxu0 0
          %654 = vmatprep.subr.bf16.mxu0 0
          %655 = vmatpush2.bf16.msra.mxu0 0
          %656 = vmatprep.subr.bf16.mxu0 0
          %657 = vmatpush2.bf16.msra.mxu0 0
          %658 = vmatprep.subr.bf16.mxu0 0
          %659 = vmatpush2.bf16.msra.mxu0 0
          %660 = vmatprep.subr.bf16.mxu0 0
          %661 = vmatpush2.bf16.msra.mxu0 0
          %662 = vmatprep.mubr.bf16.mxu0 0
          %663 = vmatmul.mubr.bf16.gmra.mxu0 %v245
          %v664 = vpop.f32.mrf.mxu0
          %v665 = vadd.f32 0.0, %v664
          %v666 = vpop.f32.mrf.mxu0
          %v667 = vadd.f32 0.0, %v666
          %v668 = vpop.f32.mrf.mxu0
          %v669 = vadd.f32 0.0, %v668
          %v670 = vpop.f32.mrf.mxu0
          %v671 = vadd.f32 0.0, %v670
          %672 = vdwg.mxu0
          %673 = vmatprep.subr.bf16.mxu0 %v561
          %674 = vmatpush1.bf16.msra.mxu0 %v560
          %675 = vmatprep.subr.bf16.mxu0 %v553
          %676 = vmatpush1.bf16.msra.mxu0 %v552
          %677 = vmatprep.subr.bf16.mxu0 %v545
          %678 = vmatpush1.bf16.msra.mxu0 %v544
          %679 = vmatprep.subr.bf16.mxu0 %v537
          %680 = vmatpush1.bf16.msra.mxu0 %v536
          %681 = vmatprep.subr.bf16.mxu0 %v529
          %682 = vmatpush1.bf16.msra.mxu0 %v528
          %683 = vmatprep.subr.bf16.mxu0 %v521
          %684 = vmatpush1.bf16.msra.mxu0 %v520
          %685 = vmatprep.subr.bf16.mxu0 %v513
          %686 = vmatpush1.bf16.msra.mxu0 %v512
          %687 = vmatprep.subr.bf16.mxu0 %v505
          %688 = vmatpush1.bf16.msra.mxu0 %v504
          %689 = vmatprep.subr.bf16.mxu0 0
          %690 = vmatpush2.bf16.msra.mxu0 0
          %691 = vmatprep.subr.bf16.mxu0 0
          %692 = vmatpush2.bf16.msra.mxu0 0
          %693 = vmatprep.subr.bf16.mxu0 0
          %694 = vmatpush2.bf16.msra.mxu0 0
          %695 = vmatprep.subr.bf16.mxu0 0
          %696 = vmatpush2.bf16.msra.mxu0 0
          %697 = vmatprep.subr.bf16.mxu0 0
          %698 = vmatpush2.bf16.msra.mxu0 0
          %699 = vmatprep.subr.bf16.mxu0 0
          %700 = vmatpush2.bf16.msra.mxu0 0
          %701 = vmatprep.subr.bf16.mxu0 0
          %702 = vmatpush2.bf16.msra.mxu0 0
          %703 = vmatprep.subr.bf16.mxu0 0
          %704 = vmatpush2.bf16.msra.mxu0 0
          %705 = vmatprep.mubr.bf16.mxu0 0
          %706 = vmatmul.mubr.bf16.gmra.mxu0 %v245
          %v707 = vpop.f32.mrf.mxu0
          %v708 = vadd.f32 0.0, %v707
          %v709 = vpop.f32.mrf.mxu0
          %v710 = vadd.f32 0.0, %v709
          %v711 = vpop.f32.mrf.mxu0
          %v712 = vadd.f32 0.0, %v711
          %v713 = vpop.f32.mrf.mxu0
          %v714 = vadd.f32 0.0, %v713
          %715 = vdwg.mxu0
          %716 = vmatprep.subr.bf16.mxu0 %v563
          %717 = vmatpush1.bf16.msra.mxu0 %v562
          %718 = vmatprep.subr.bf16.mxu0 %v555
          %719 = vmatpush1.bf16.msra.mxu0 %v554
          %720 = vmatprep.subr.bf16.mxu0 %v547
          %721 = vmatpush1.bf16.msra.mxu0 %v546
          %722 = vmatprep.subr.bf16.mxu0 %v539
          %723 = vmatpush1.bf16.msra.mxu0 %v538
          %724 = vmatprep.subr.bf16.mxu0 %v531
          %725 = vmatpush1.bf16.msra.mxu0 %v530
          %726 = vmatprep.subr.bf16.mxu0 %v523
          %727 = vmatpush1.bf16.msra.mxu0 %v522
          %728 = vmatprep.subr.bf16.mxu0 %v515
          %729 = vmatpush1.bf16.msra.mxu0 %v514
          %730 = vmatprep.subr.bf16.mxu0 %v507
          %731 = vmatpush1.bf16.msra.mxu0 %v506
          %732 = vmatprep.subr.bf16.mxu0 0
          %733 = vmatpush2.bf16.msra.mxu0 0
          %734 = vmatprep.subr.bf16.mxu0 0
          %735 = vmatpush2.bf16.msra.mxu0 0
          %736 = vmatprep.subr.bf16.mxu0 0
          %737 = vmatpush2.bf16.msra.mxu0 0
          %738 = vmatprep.subr.bf16.mxu0 0
          %739 = vmatpush2.bf16.msra.mxu0 0
          %740 = vmatprep.subr.bf16.mxu0 0
          %741 = vmatpush2.bf16.msra.mxu0 0
          %742 = vmatprep.subr.bf16.mxu0 0
          %743 = vmatpush2.bf16.msra.mxu0 0
          %744 = vmatprep.subr.bf16.mxu0 0
          %745 = vmatpush2.bf16.msra.mxu0 0
          %746 = vmatprep.subr.bf16.mxu0 0
          %747 = vmatpush2.bf16.msra.mxu0 0
          %748 = vmatprep.mubr.bf16.mxu0 0
          %749 = vmatmul.mubr.bf16.gmra.mxu0 %v245
          %v750 = vpop.f32.mrf.mxu0
          %v751 = vadd.f32 0.0, %v750
          %v752 = vpop.f32.mrf.mxu0
          %v753 = vadd.f32 0.0, %v752
          %v754 = vpop.f32.mrf.mxu0
          %v755 = vadd.f32 0.0, %v754
          %v756 = vpop.f32.mrf.mxu0
          %v757 = vadd.f32 0.0, %v756
          %758 = vdwg.mxu0
          %759 = vmatprep.subr.bf16.mxu0 %v565
          %760 = vmatpush1.bf16.msra.mxu0 %v564
          %761 = vmatprep.subr.bf16.mxu0 %v557
          %762 = vmatpush1.bf16.msra.mxu0 %v556
          %763 = vmatprep.subr.bf16.mxu0 %v549
          %764 = vmatpush1.bf16.msra.mxu0 %v548
          %765 = vmatprep.subr.bf16.mxu0 %v541
          %766 = vmatpush1.bf16.msra.mxu0 %v540
          %767 = vmatprep.subr.bf16.mxu0 %v533
          %768 = vmatpush1.bf16.msra.mxu0 %v532
          %769 = vmatprep.subr.bf16.mxu0 %v525
          %770 = vmatpush1.bf16.msra.mxu0 %v524
          %771 = vmatprep.subr.bf16.mxu0 %v517
          %772 = vmatpush1.bf16.msra.mxu0 %v516
          %773 = vmatprep.subr.bf16.mxu0 %v509
          %774 = vmatpush1.bf16.msra.mxu0 %v508
          %775 = vmatprep.subr.bf16.mxu0 0
          %776 = vmatpush2.bf16.msra.mxu0 0
          %777 = vmatprep.subr.bf16.mxu0 0
          %778 = vmatpush2.bf16.msra.mxu0 0
          %779 = vmatprep.subr.bf16.mxu0 0
          %780 = vmatpush2.bf16.msra.mxu0 0
          %781 = vmatprep.subr.bf16.mxu0 0
          %782 = vmatpush2.bf16.msra.mxu0 0
          %783 = vmatprep.subr.bf16.mxu0 0
          %784 = vmatpush2.bf16.msra.mxu0 0
          %785 = vmatprep.subr.bf16.mxu0 0
          %786 = vmatpush2.bf16.msra.mxu0 0
          %787 = vmatprep.subr.bf16.mxu0 0
          %788 = vmatpush2.bf16.msra.mxu0 0
          %789 = vmatprep.subr.bf16.mxu0 0
          %790 = vmatpush2.bf16.msra.mxu0 0
          %791 = vmatprep.mubr.bf16.mxu0 0
          %792 = vmatmul.mubr.bf16.gmra.mxu0 %v245
          %v793 = vpop.f32.mrf.mxu0
          %v794 = vadd.f32 0.0, %v793
          %v795 = vpop.f32.mrf.mxu0
          %v796 = vadd.f32 0.0, %v795
          %v797 = vpop.f32.mrf.mxu0
          %v798 = vadd.f32 0.0, %v797
          %v799 = vpop.f32.mrf.mxu0
          %v800 = vadd.f32 0.0, %v799
          %801 = vdwg.mxu0
          %v802 = vpack.c.bf16 %v669, %v665
          %v803 = vpack.c.bf16 %v671, %v667
          %v804 = vpack.c.bf16 %v712, %v708
          %v805 = vpack.c.bf16 %v714, %v710
          %v806 = vpack.c.bf16 %v755, %v751
          %v807 = vpack.c.bf16 %v757, %v753
          %v808 = vpack.c.bf16 %v798, %v794
          %v809 = vpack.c.bf16 %v800, %v796
          %v818 = vunpack.c.l.b16 %v802
          %v819 = vunpack.c.l.b16 %v803
          %v820 = vunpack.c.l.b16 %v804
          %v821 = vunpack.c.l.b16 %v805
          %v822 = vunpack.c.l.b16 %v806
          %v823 = vunpack.c.l.b16 %v807
          %v824 = vunpack.c.l.b16 %v808
          %v825 = vunpack.c.l.b16 %v809
          %v826 = vunpack.c.h.b16 %v802
          %v827 = vunpack.c.h.b16 %v803
          %v828 = vunpack.c.h.b16 %v804
          %v829 = vunpack.c.h.b16 %v805
          %v830 = vunpack.c.h.b16 %v806
          %v831 = vunpack.c.h.b16 %v807
          %v832 = vunpack.c.h.b16 %v808
          %v833 = vunpack.c.h.b16 %v809
          %v834 = vpack.c.b16 %v819, %v818
          %v835 = vpack.c.b16 %v821, %v820
          %v836 = vpack.c.b16 %v823, %v822
          %v837 = vpack.c.b16 %v825, %v824
          %v838 = vpack.c.b16 %v827, %v826
          %v839 = vpack.c.b16 %v829, %v828
          %v840 = vpack.c.b16 %v831, %v830
          %v841 = vpack.c.b16 %v833, %v832
          %850 = vst [vmem:[#allocation2] sm:$0xff] %v834
          %851 = vst [vmem:[#allocation2 + $0x8] sm:$0xff] %v835
          %852 = vst [vmem:[#allocation2 + $0x10] sm:$0xff] %v836
          %853 = vst [vmem:[#allocation2 + $0x18] sm:$0xff] %v837
          %854 = vst [vmem:[#allocation2 + $0x20] sm:$0xff] %v838
          %855 = vst [vmem:[#allocation2 + $0x28] sm:$0xff] %v839
          %856 = vst [vmem:[#allocation2 + $0x30] sm:$0xff] %v840
          %857 = vst [vmem:[#allocation2 + $0x38] sm:$0xff] %v841
        $region44: #{attention.1} parent=39 // pred_fallthru
          _
        %v858 = vld [vmem:[%s236] sm:$0xff]
        %v859 = vld [vmem:[%s236 + $0x8] sm:$0xff]
        %v860 = vpack.c.bf16 %v859, %v858
        %v861 = vld [vmem:[%s1] sm:$0xff]
        %v862 = vld [vmem:[%s1 + $0x8] sm:$0xff]
        %v863 = vld [vmem:[%s1 + $0x10] sm:$0xff]
        %v864 = vld [vmem:[%s1 + $0x18] sm:$0xff]
        %v865 = vld [vmem:[%s1 + $0x20] sm:$0xff]
        %v866 = vld [vmem:[%s1 + $0x28] sm:$0xff]
        %v867 = vld [vmem:[%s1 + $0x30] sm:$0xff]
        %v868 = vld [vmem:[%s1 + $0x38] sm:$0xff]
        %v869 = vld [vmem:[%s1 + $0x40] sm:$0xff]
        %v870 = vld [vmem:[%s1 + $0x48] sm:$0xff]
        %v871 = vld [vmem:[%s1 + $0x50] sm:$0xff]
        %v872 = vld [vmem:[%s1 + $0x58] sm:$0xff]
        %v873 = vld [vmem:[%s1 + $0x60] sm:$0xff]
        %v874 = vld [vmem:[%s1 + $0x68] sm:$0xff]
        %v875 = vld [vmem:[%s1 + $0x70] sm:$0xff]
        %v876 = vld [vmem:[%s1 + $0x78] sm:$0xff]
        %v877 = vld [vmem:[%s1 + $0x80] sm:$0xff]
        %v878 = vld [vmem:[%s1 + $0x88] sm:$0xff]
        %v879 = vld [vmem:[%s1 + $0x90] sm:$0xff]
        %v880 = vld [vmem:[%s1 + $0x98] sm:$0xff]
        %v881 = vld [vmem:[%s1 + $0xa0] sm:$0xff]
        %v882 = vld [vmem:[%s1 + $0xa8] sm:$0xff]
        %v883 = vld [vmem:[%s1 + $0xb0] sm:$0xff]
        %v884 = vld [vmem:[%s1 + $0xb8] sm:$0xff]
        %v885 = vld [vmem:[%s1 + $0xc0] sm:$0xff]
        %v886 = vld [vmem:[%s1 + $0xc8] sm:$0xff]
        %v887 = vld [vmem:[%s1 + $0xd0] sm:$0xff]
        %v888 = vld [vmem:[%s1 + $0xd8] sm:$0xff]
        %v889 = vld [vmem:[%s1 + $0xe0] sm:$0xff]
        %v890 = vld [vmem:[%s1 + $0xe8] sm:$0xff]
        %v891 = vld [vmem:[%s1 + $0xf0] sm:$0xff]
        %v892 = vld [vmem:[%s1 + $0xf8] sm:$0xff]
        %v925 = vunpack.c.l.b16 %v861
        %v926 = vunpack.c.h.b16 %v861
        %v927 = vunpack.c.l.b16 %v862
        %v928 = vunpack.c.h.b16 %v862
        %v929 = vunpack.c.l.b16 %v863
        %v930 = vunpack.c.h.b16 %v863
        %v931 = vunpack.c.l.b16 %v864
        %v932 = vunpack.c.h.b16 %v864
        %v933 = vunpack.c.l.b16 %v865
        %v934 = vunpack.c.h.b16 %v865
        %v935 = vunpack.c.l.b16 %v866
        %v936 = vunpack.c.h.b16 %v866
        %v937 = vunpack.c.l.b16 %v867
        %v938 = vunpack.c.h.b16 %v867
        %v939 = vunpack.c.l.b16 %v868
        %v940 = vunpack.c.h.b16 %v868
        %v941 = vunpack.c.l.b16 %v869
        %v942 = vunpack.c.h.b16 %v869
        %v943 = vunpack.c.l.b16 %v870
        %v944 = vunpack.c.h.b16 %v870
        %v945 = vunpack.c.l.b16 %v871
        %v946 = vunpack.c.h.b16 %v871
        %v947 = vunpack.c.l.b16 %v872
        %v948 = vunpack.c.h.b16 %v872
        %v949 = vunpack.c.l.b16 %v873
        %v950 = vunpack.c.h.b16 %v873
        %v951 = vunpack.c.l.b16 %v874
        %v952 = vunpack.c.h.b16 %v874
        %v953 = vunpack.c.l.b16 %v875
        %v954 = vunpack.c.h.b16 %v875
        %v955 = vunpack.c.l.b16 %v876
        %v956 = vunpack.c.h.b16 %v876
        %v957 = vunpack.c.l.b16 %v877
        %v958 = vunpack.c.h.b16 %v877
        %v959 = vunpack.c.l.b16 %v878
        %v960 = vunpack.c.h.b16 %v878
        %v961 = vunpack.c.l.b16 %v879
        %v962 = vunpack.c.h.b16 %v879
        %v963 = vunpack.c.l.b16 %v880
        %v964 = vunpack.c.h.b16 %v880
        %v965 = vunpack.c.l.b16 %v881
        %v966 = vunpack.c.h.b16 %v881
        %v967 = vunpack.c.l.b16 %v882
        %v968 = vunpack.c.h.b16 %v882
        %v969 = vunpack.c.l.b16 %v883
        %v970 = vunpack.c.h.b16 %v883
        %v971 = vunpack.c.l.b16 %v884
        %v972 = vunpack.c.h.b16 %v884
        %v973 = vunpack.c.l.b16 %v885
        %v974 = vunpack.c.h.b16 %v885
        %v975 = vunpack.c.l.b16 %v886
        %v976 = vunpack.c.h.b16 %v886
        %v977 = vunpack.c.l.b16 %v887
        %v978 = vunpack.c.h.b16 %v887
        %v979 = vunpack.c.l.b16 %v888
        %v980 = vunpack.c.h.b16 %v888
        %v981 = vunpack.c.l.b16 %v889
        %v982 = vunpack.c.h.b16 %v889
        %v983 = vunpack.c.l.b16 %v890
        %v984 = vunpack.c.h.b16 %v890
        %v985 = vunpack.c.l.b16 %v891
        %v986 = vunpack.c.h.b16 %v891
        %v987 = vunpack.c.l.b16 %v892
        %v988 = vunpack.c.h.b16 %v892
        %v989 = vpack.c.b16 %v929, %v925
        %v990 = vpack.c.b16 %v930, %v926
        %v991 = vpack.c.b16 %v931, %v927
        %v992 = vpack.c.b16 %v932, %v928
        %v993 = vpack.c.b16 %v937, %v933
        %v994 = vpack.c.b16 %v938, %v934
        %v995 = vpack.c.b16 %v939, %v935
        %v996 = vpack.c.b16 %v940, %v936
        %v997 = vpack.c.b16 %v945, %v941
        %v998 = vpack.c.b16 %v946, %v942
        %v999 = vpack.c.b16 %v947, %v943
        %v1000 = vpack.c.b16 %v948, %v944
        %v1001 = vpack.c.b16 %v953, %v949
        %v1002 = vpack.c.b16 %v954, %v950
        %v1003 = vpack.c.b16 %v955, %v951
        %v1004 = vpack.c.b16 %v956, %v952
        %v1005 = vpack.c.b16 %v961, %v957
        %v1006 = vpack.c.b16 %v962, %v958
        %v1007 = vpack.c.b16 %v963, %v959
        %v1008 = vpack.c.b16 %v964, %v960
        %v1009 = vpack.c.b16 %v969, %v965
        %v1010 = vpack.c.b16 %v970, %v966
        %v1011 = vpack.c.b16 %v971, %v967
        %v1012 = vpack.c.b16 %v972, %v968
        %v1013 = vpack.c.b16 %v977, %v973
        %v1014 = vpack.c.b16 %v978, %v974
        %v1015 = vpack.c.b16 %v979, %v975
        %v1016 = vpack.c.b16 %v980, %v976
        %v1017 = vpack.c.b16 %v985, %v981
        %v1018 = vpack.c.b16 %v986, %v982
        %v1019 = vpack.c.b16 %v987, %v983
        %v1020 = vpack.c.b16 %v988, %v984
        %1053 = vmatprep.subr.bf16.mxu0 %v1018
        %1054 = vmatpush1.bf16.msra.mxu0 %v1017
        %1055 = vmatprep.subr.bf16.mxu0 %v1014
        %1056 = vmatpush1.bf16.msra.mxu0 %v1013
        %1057 = vmatprep.subr.bf16.mxu0 %v1010
        %1058 = vmatpush1.bf16.msra.mxu0 %v1009
        %1059 = vmatprep.subr.bf16.mxu0 %v1006
        %1060 = vmatpush1.bf16.msra.mxu0 %v1005
        %1061 = vmatprep.subr.bf16.mxu0 %v1002
        %1062 = vmatpush1.bf16.msra.mxu0 %v1001
        %1063 = vmatprep.subr.bf16.mxu0 %v998
        %1064 = vmatpush1.bf16.msra.mxu0 %v997
        %1065 = vmatprep.subr.bf16.mxu0 %v994
        %1066 = vmatpush1.bf16.msra.mxu0 %v993
        %1067 = vmatprep.subr.bf16.mxu0 %v990
        %1068 = vmatpush1.bf16.msra.mxu0 %v989
        %1069 = vmatprep.subr.bf16.mxu0 0
        %1070 = vmatpush2.bf16.msra.mxu0 0
        %1071 = vmatprep.subr.bf16.mxu0 0
        %1072 = vmatpush2.bf16.msra.mxu0 0
        %1073 = vmatprep.subr.bf16.mxu0 0
        %1074 = vmatpush2.bf16.msra.mxu0 0
        %1075 = vmatprep.subr.bf16.mxu0 0
        %1076 = vmatpush2.bf16.msra.mxu0 0
        %1077 = vmatprep.subr.bf16.mxu0 0
        %1078 = vmatpush2.bf16.msra.mxu0 0
        %1079 = vmatprep.subr.bf16.mxu0 0
        %1080 = vmatpush2.bf16.msra.mxu0 0
        %1081 = vmatprep.subr.bf16.mxu0 0
        %1082 = vmatpush2.bf16.msra.mxu0 0
        %1083 = vmatprep.subr.bf16.mxu0 0
        %1084 = vmatpush2.bf16.msra.mxu0 0
        %1085 = vmatprep.mubr.bf16.mxu0 0
        %1086 = vmatmul.mubr.bf16.gmra.mxu0 %v860
        %v1087 = vpop.f32.mrf.mxu0
        %v1088 = vadd.f32 0.0, %v1087
        %v1089 = vpop.f32.mrf.mxu0
        %v1090 = vadd.f32 0.0, %v1089
        %v1091 = vpop.f32.mrf.mxu0
        %v1092 = vadd.f32 0.0, %v1091
        %v1093 = vpop.f32.mrf.mxu0
        %v1094 = vadd.f32 0.0, %v1093
        %1095 = vdwg.mxu0
        %1096 = vmatprep.subr.bf16.mxu0 %v1020
        %1097 = vmatpush1.bf16.msra.mxu0 %v1019
        %1098 = vmatprep.subr.bf16.mxu0 %v1016
        %1099 = vmatpush1.bf16.msra.mxu0 %v1015
        %1100 = vmatprep.subr.bf16.mxu0 %v1012
        %1101 = vmatpush1.bf16.msra.mxu0 %v1011
        %1102 = vmatprep.subr.bf16.mxu0 %v1008
        %1103 = vmatpush1.bf16.msra.mxu0 %v1007
        %1104 = vmatprep.subr.bf16.mxu0 %v1004
        %1105 = vmatpush1.bf16.msra.mxu0 %v1003
        %1106 = vmatprep.subr.bf16.mxu0 %v1000
        %1107 = vmatpush1.bf16.msra.mxu0 %v999
        %1108 = vmatprep.subr.bf16.mxu0 %v996
        %1109 = vmatpush1.bf16.msra.mxu0 %v995
        %1110 = vmatprep.subr.bf16.mxu0 %v992
        %1111 = vmatpush1.bf16.msra.mxu0 %v991
        %1112 = vmatprep.subr.bf16.mxu0 0
        %1113 = vmatpush2.bf16.msra.mxu0 0
        %1114 = vmatprep.subr.bf16.mxu0 0
        %1115 = vmatpush2.bf16.msra.mxu0 0
        %1116 = vmatprep.subr.bf16.mxu0 0
        %1117 = vmatpush2.bf16.msra.mxu0 0
        %1118 = vmatprep.subr.bf16.mxu0 0
        %1119 = vmatpush2.bf16.msra.mxu0 0
        %1120 = vmatprep.subr.bf16.mxu0 0
        %1121 = vmatpush2.bf16.msra.mxu0 0
        %1122 = vmatprep.subr.bf16.mxu0 0
        %1123 = vmatpush2.bf16.msra.mxu0 0
        %1124 = vmatprep.subr.bf16.mxu0 0
        %1125 = vmatpush2.bf16.msra.mxu0 0
        %1126 = vmatprep.subr.bf16.mxu0 0
        %1127 = vmatpush2.bf16.msra.mxu0 0
        %1128 = vmatprep.mubr.bf16.mxu0 0
        %1129 = vmatmul.mubr.bf16.gmra.mxu0 %v860
        %v1130 = vpop.f32.mrf.mxu0
        %v1131 = vadd.f32 0.0, %v1130
        %v1132 = vpop.f32.mrf.mxu0
        %v1133 = vadd.f32 0.0, %v1132
        %v1134 = vpop.f32.mrf.mxu0
        %v1135 = vadd.f32 0.0, %v1134
        %v1136 = vpop.f32.mrf.mxu0
        %v1137 = vadd.f32 0.0, %v1136
        %1138 = vdwg.mxu0
        %v1139 = vmul.f32 %v1088, 0.125
        %v1140 = vmul.f32 %v1090, 0.125
        %v1141 = vmul.f32 %v1131, 0.125
        %v1142 = vmul.f32 %v1133, 0.125
        %v1143 = vmul.f32 %v1092, 0.125
        %v1144 = vmul.f32 %v1094, 0.125
        %v1145 = vmul.f32 %v1135, 0.125
        %v1146 = vmul.f32 %v1137, 0.125
        %v1147 = vpack.c.bf16 %v1143, %v1139
        %v1148 = vpack.c.bf16 %v1144, %v1140
        %v1149 = vpack.c.bf16 %v1145, %v1141
        %v1150 = vpack.c.bf16 %v1146, %v1142
        %v1151 = vld [vmem:[#allocation2] sm:$0xf]
        %v1152 = vld [vmem:[#allocation2 + $0x20] sm:$0xf]
        %v1153 = vld [vmem:[#allocation2 + $0x10] sm:$0xf]
        %v1154 = vld [vmem:[#allocation2 + $0x30] sm:$0xf]
        %v1157 = vunpack.c.l.b16 %v1151
        %v1158 = vunpack.c.l.b16 %v1152
        %v1159 = vpack.c.b16 %v1158, %v1157
        %vm1160 = vcmask 523264
        %v1162 = vsel %vm1160, %v1147, 0
        %v1165 = vsel %vm1160, %v1159, 0
        %1167 = vmatprep.subr.bf16.mxu0 0
        %1168 = vmatpush1.bf16.xpose.msra.mxu0 0
        %1169 = vmatprep.subr.bf16.mxu0 0
        %1170 = vmatpush1.bf16.xpose.msra.mxu0 0
        %1171 = vmatprep.subr.bf16.mxu0 0
        %1172 = vmatpush1.bf16.xpose.msra.mxu0 0
        %1173 = vmatprep.subr.bf16.mxu0 0
        %1174 = vmatpush1.bf16.xpose.msra.mxu0 0
        %1175 = vmatprep.subr.bf16.mxu0 0
        %1176 = vmatpush1.bf16.xpose.msra.mxu0 0
        %1177 = vmatprep.subr.bf16.mxu0 0
        %1178 = vmatpush1.bf16.xpose.msra.mxu0 0
        %1179 = vmatprep.subr.bf16.mxu0 0
        %1180 = vmatpush1.bf16.xpose.msra.mxu0 0
        %1181 = vmatprep.subr.bf16.mxu0 0
        %1182 = vmatpush1.bf16.xpose.msra.mxu0 %v1165
        %1183 = vmatprep.subr.bf16.mxu0 0
        %1184 = vmatpush2.bf16.xpose.msra.mxu0 0
        %1185 = vmatprep.subr.bf16.mxu0 0
        %1186 = vmatpush2.bf16.xpose.msra.mxu0 0
        %1187 = vmatprep.subr.bf16.mxu0 0
        %1188 = vmatpush2.bf16.xpose.msra.mxu0 0
        %1189 = vmatprep.subr.bf16.mxu0 0
        %1190 = vmatpush2.bf16.xpose.msra.mxu0 0
        %1191 = vmatprep.subr.bf16.mxu0 0
        %1192 = vmatpush2.bf16.xpose.msra.mxu0 0
        %1193 = vmatprep.subr.bf16.mxu0 0
        %1194 = vmatpush2.bf16.xpose.msra.mxu0 0
        %1195 = vmatprep.subr.bf16.mxu0 0
        %1196 = vmatpush2.bf16.xpose.msra.mxu0 0
        %1197 = vmatprep.subr.bf16.mxu0 0
        %1198 = vmatpush2.bf16.xpose.msra.mxu0 0
        %1199 = vmatprep.mubr.bf16.mxu0 0
        %1200 = vmatmul.mubr.bf16.gmra.mxu0 %v1162
        %v1201 = vpop.f32.mrf.mxu0
        %v1202 = vadd.f32 0.0, %v1201
        %v1203 = vpop.f32.mrf.mxu0
        %v1204 = vpop.f32.mrf.mxu0
        %v1205 = vadd.f32 0.0, %v1204
        %v1206 = vpop.f32.mrf.mxu0
        %1207 = vdwg.mxu0
        %vm1208 = vcmask 130048
        %v1209 = vsel %vm1208, %v1202, -inf
        %1210 = vmax.xlane.f32.xlu0 %v1209
        %v1211 = vpop.xlane.xlu0 %1210
        %v1212 = vsel %vm1208, %v1205, -inf
        %1213 = vmax.xlane.f32.xlu0 %v1212
        %v1214 = vpop.xlane.xlu0 %1213
        %v1215 = vsub.f32 %v1202, %v1211
        %v1216 = vsub.f32 %v1205, %v1214
        %v1217 = vmul.f32 %v1215, 1.442695
        %v1218 = vpow.pop %v1217
        %v1219 = vmul.f32 %v1216, 1.442695
        %v1220 = vpow.pop %v1219
        %v1221 = vsel %vm1208, %v1218, 0.0
        %1222 = vadd.xlane.f32.xlu0 %v1221
        %v1223 = vpop.xlane.xlu0 %1222
        %v1224 = vsel %vm1208, %v1220, 0.0
        %1225 = vadd.xlane.f32.xlu0 %v1224
        %v1226 = vpop.xlane.xlu0 %1225
        %v1227 = vpack.c.bf16 %v1220, %v1218
        %v1230 = vunpack.c.l.b16 %v1153
        %v1231 = vunpack.c.l.b16 %v1154
        %v1232 = vpack.c.b16 %v1231, %v1230
        %v1235 = vsel %vm1208, %v1227, 0
        %1237 = vmatprep.subr.bf16.mxu0 0
        %1238 = vmatpush1.bf16.msra.mxu0 0
        %1239 = vmatprep.subr.bf16.mxu0 0
        %1240 = vmatpush1.bf16.msra.mxu0 0
        %1241 = vmatprep.subr.bf16.mxu0 0
        %1242 = vmatpush1.bf16.msra.mxu0 0
        %1243 = vmatprep.subr.bf16.mxu0 0
        %1244 = vmatpush1.bf16.msra.mxu0 0
        %1245 = vmatprep.subr.bf16.mxu0 0
        %1246 = vmatpush1.bf16.msra.mxu0 0
        %1247 = vmatprep.subr.bf16.mxu0 0
        %1248 = vmatpush1.bf16.msra.mxu0 0
        %1249 = vmatprep.subr.bf16.mxu0 0
        %1250 = vmatpush1.bf16.msra.mxu0 0
        %1251 = vmatprep.subr.bf16.mxu0 0
        %1252 = vmatpush1.bf16.msra.mxu0 %v1232
        %1253 = vmatprep.subr.bf16.mxu0 0
        %1254 = vmatpush2.bf16.msra.mxu0 0
        %1255 = vmatprep.subr.bf16.mxu0 0
        %1256 = vmatpush2.bf16.msra.mxu0 0
        %1257 = vmatprep.subr.bf16.mxu0 0
        %1258 = vmatpush2.bf16.msra.mxu0 0
        %1259 = vmatprep.subr.bf16.mxu0 0
        %1260 = vmatpush2.bf16.msra.mxu0 0
        %1261 = vmatprep.subr.bf16.mxu0 0
        %1262 = vmatpush2.bf16.msra.mxu0 0
        %1263 = vmatprep.subr.bf16.mxu0 0
        %1264 = vmatpush2.bf16.msra.mxu0 0
        %1265 = vmatprep.subr.bf16.mxu0 0
        %1266 = vmatpush2.bf16.msra.mxu0 0
        %1267 = vmatprep.subr.bf16.mxu0 0
        %1268 = vmatpush2.bf16.msra.mxu0 0
        %1269 = vmatprep.mubr.bf16.mxu0 0
        %1270 = vmatmul.mubr.bf16.gmra.mxu0 %v1235
        %v1271 = vpop.f32.mrf.mxu0
        %v1272 = vadd.f32 0.0, %v1271
        %v1273 = vpop.f32.mrf.mxu0
        %v1274 = vpop.f32.mrf.mxu0
        %v1275 = vadd.f32 0.0, %v1274
        %v1276 = vpop.f32.mrf.mxu0
        %1277 = vdwg.mxu0
        %v1278 = vrcp.pop %v1223
        %v1279 = vrcp.pop %v1226
        %v1280 = vmul.f32 %v1272, %v1278
        %v1281 = vmul.f32 %v1275, %v1279
        %v1282 = vpack.c.bf16 %v1281, %v1280
        %v1284 = vunpack.c.l.b16 %v1282
        %v1285 = vunpack.c.h.b16 %v1282
        %v1286 = vpack.c.b16 %v1284, %v1284
        %v1287 = vpack.c.b16 %v1285, %v1285
        %vm1290 = vcmask 519168
        %1291 = vst.msk [vmem:[#allocation3] sm:$0xf] %vm1290, %v1286
        %1292 = vst.msk [vmem:[#allocation3 + $0x10] sm:$0xf] %vm1290, %v1287
        %v1293 = vld [vmem:[#allocation2] sm:$0xf]
        %v1294 = vld [vmem:[#allocation2 + $0x20] sm:$0xf]
        %v1295 = vld [vmem:[#allocation2 + $0x10] sm:$0xf]
        %v1296 = vld [vmem:[#allocation2 + $0x30] sm:$0xf]
        %1298 = vrot.lane.b32.xlu0 %v1147, 64
        %v1299 = vpop.permute.xlu0 %1298
        %v1302 = vunpack.c.l.b16 %v1293
        %v1303 = vunpack.c.l.b16 %v1294
        %v1304 = vpack.c.b16 %v1303, %v1302
        %1305 = vrot.lane.b32.xlu0 %v1304, 64
        %v1306 = vpop.permute.xlu0 %1305
        %v1308 = vsel %vm1160, %v1299, 0
        %v1311 = vsel %vm1160, %v1306, 0
        %1313 = vmatprep.subr.bf16.mxu0 0
        %1314 = vmatpush1.bf16.xpose.msra.mxu0 0
        %1315 = vmatprep.subr.bf16.mxu0 0
        %1316 = vmatpush1.bf16.xpose.msra.mxu0 0
        %1317 = vmatprep.subr.bf16.mxu0 0
        %1318 = vmatpush1.bf16.xpose.msra.mxu0 0
        %1319 = vmatprep.subr.bf16.mxu0 0
        %1320 = vmatpush1.bf16.xpose.msra.mxu0 0
        %1321 = vmatprep.subr.bf16.mxu0 0
        %1322 = vmatpush1.bf16.xpose.msra.mxu0 0
        %1323 = vmatprep.subr.bf16.mxu0 0
        %1324 = vmatpush1.bf16.xpose.msra.mxu0 0
        %1325 = vmatprep.subr.bf16.mxu0 0
        %1326 = vmatpush1.bf16.xpose.msra.mxu0 0
        %1327 = vmatprep.subr.bf16.mxu0 0
        %1328 = vmatpush1.bf16.xpose.msra.mxu0 %v1311
        %1329 = vmatprep.subr.bf16.mxu0 0
        %1330 = vmatpush2.bf16.xpose.msra.mxu0 0
        %1331 = vmatprep.subr.bf16.mxu0 0
        %1332 = vmatpush2.bf16.xpose.msra.mxu0 0
        %1333 = vmatprep.subr.bf16.mxu0 0
        %1334 = vmatpush2.bf16.xpose.msra.mxu0 0
        %1335 = vmatprep.subr.bf16.mxu0 0
        %1336 = vmatpush2.bf16.xpose.msra.mxu0 0
        %1337 = vmatprep.subr.bf16.mxu0 0
        %1338 = vmatpush2.bf16.xpose.msra.mxu0 0
        %1339 = vmatprep.subr.bf16.mxu0 0
        %1340 = vmatpush2.bf16.xpose.msra.mxu0 0
        %1341 = vmatprep.subr.bf16.mxu0 0
        %1342 = vmatpush2.bf16.xpose.msra.mxu0 0
        %1343 = vmatprep.subr.bf16.mxu0 0
        %1344 = vmatpush2.bf16.xpose.msra.mxu0 0
        %1345 = vmatprep.mubr.bf16.mxu0 0
        %1346 = vmatmul.mubr.bf16.gmra.mxu0 %v1308
        %v1347 = vpop.f32.mrf.mxu0
        %v1348 = vadd.f32 0.0, %v1347
        %v1349 = vpop.f32.mrf.mxu0
        %v1350 = vpop.f32.mrf.mxu0
        %v1351 = vadd.f32 0.0, %v1350
        %v1352 = vpop.f32.mrf.mxu0
        %1353 = vdwg.mxu0
        %v1354 = vsel %vm1208, %v1348, -inf
        %1355 = vmax.xlane.f32.xlu0 %v1354
        %v1356 = vpop.xlane.xlu0 %1355
        %v1357 = vsel %vm1208, %v1351, -inf
        %1358 = vmax.xlane.f32.xlu0 %v1357
        %v1359 = vpop.xlane.xlu0 %1358
        %v1360 = vsub.f32 %v1348, %v1356
        %v1361 = vsub.f32 %v1351, %v1359
        %v1362 = vmul.f32 %v1360, 1.442695
        %v1363 = vpow.pop %v1362
        %v1364 = vmul.f32 %v1361, 1.442695
        %v1365 = vpow.pop %v1364
        %v1366 = vsel %vm1208, %v1363, 0.0
        %1367 = vadd.xlane.f32.xlu0 %v1366
        %v1368 = vpop.xlane.xlu0 %1367
        %v1369 = vsel %vm1208, %v1365, 0.0
        %1370 = vadd.xlane.f32.xlu0 %v1369
        %v1371 = vpop.xlane.xlu0 %1370
        %v1372 = vpack.c.bf16 %v1365, %v1363
        %v1375 = vunpack.c.l.b16 %v1295
        %v1376 = vunpack.c.l.b16 %v1296
        %v1377 = vpack.c.b16 %v1376, %v1375
        %1378 = vrot.lane.b32.xlu0 %v1377, 64
        %v1379 = vpop.permute.xlu0 %1378
        %v1382 = vsel %vm1208, %v1372, 0
        %1384 = vmatprep.subr.bf16.mxu0 0
        %1385 = vmatpush1.bf16.msra.mxu0 0
        %1386 = vmatprep.subr.bf16.mxu0 0
        %1387 = vmatpush1.bf16.msra.mxu0 0
        %1388 = vmatprep.subr.bf16.mxu0 0
        %1389 = vmatpush1.bf16.msra.mxu0 0
        %1390 = vmatprep.subr.bf16.mxu0 0
        %1391 = vmatpush1.bf16.msra.mxu0 0
        %1392 = vmatprep.subr.bf16.mxu0 0
        %1393 = vmatpush1.bf16.msra.mxu0 0
        %1394 = vmatprep.subr.bf16.mxu0 0
        %1395 = vmatpush1.bf16.msra.mxu0 0
        %1396 = vmatprep.subr.bf16.mxu0 0
        %1397 = vmatpush1.bf16.msra.mxu0 0
        %1398 = vmatprep.subr.bf16.mxu0 0
        %1399 = vmatpush1.bf16.msra.mxu0 %v1379
        %1400 = vmatprep.subr.bf16.mxu0 0
        %1401 = vmatpush2.bf16.msra.mxu0 0
        %1402 = vmatprep.subr.bf16.mxu0 0
        %1403 = vmatpush2.bf16.msra.mxu0 0
        %1404 = vmatprep.subr.bf16.mxu0 0
        %1405 = vmatpush2.bf16.msra.mxu0 0
        %1406 = vmatprep.subr.bf16.mxu0 0
        %1407 = vmatpush2.bf16.msra.mxu0 0
        %1408 = vmatprep.subr.bf16.mxu0 0
        %1409 = vmatpush2.bf16.msra.mxu0 0
        %1410 = vmatprep.subr.bf16.mxu0 0
        %1411 = vmatpush2.bf16.msra.mxu0 0
        %1412 = vmatprep.subr.bf16.mxu0 0
        %1413 = vmatpush2.bf16.msra.mxu0 0
        %1414 = vmatprep.subr.bf16.mxu0 0
        %1415 = vmatpush2.bf16.msra.mxu0 0
        %1416 = vmatprep.mubr.bf16.mxu0 0
        %1417 = vmatmul.mubr.bf16.gmra.mxu0 %v1382
        %v1418 = vpop.f32.mrf.mxu0
        %v1419 = vadd.f32 0.0, %v1418
        %v1420 = vpop.f32.mrf.mxu0
        %v1421 = vpop.f32.mrf.mxu0
        %v1422 = vadd.f32 0.0, %v1421
        %v1423 = vpop.f32.mrf.mxu0
        %1424 = vdwg.mxu0
        %v1425 = vrcp.pop %v1368
        %v1426 = vrcp.pop %v1371
        %v1427 = vmul.f32 %v1419, %v1425
        %v1428 = vmul.f32 %v1422, %v1426
        %v1429 = vpack.c.bf16 %v1428, %v1427
        %v1431 = vunpack.c.l.b16 %v1429
        %v1432 = vunpack.c.h.b16 %v1429
        %v1433 = vpack.c.b16 %v1431, %v1431
        %v1434 = vpack.c.b16 %v1432, %v1432
        %1435 = vrot.lane.b32.xlu0 %v1433, 64
        %v1436 = vpop.permute.xlu0 %1435
        %1437 = vrot.lane.b32.xlu0 %v1434, 64
        %v1438 = vpop.permute.xlu0 %1437
        %vm1441 = vcmask 1043968
        %1442 = vst.msk [vmem:[#allocation3] sm:$0xf] %vm1441, %v1436
        %1443 = vst.msk [vmem:[#allocation3 + $0x10] sm:$0xf] %vm1441, %v1438
        %v1444 = vld [vmem:[#allocation2 + $0x4] sm:$0xf]
        %v1445 = vld [vmem:[#allocation2 + $0x24] sm:$0xf]
        %v1446 = vld [vmem:[#allocation2 + $0x14] sm:$0xf]
        %v1447 = vld [vmem:[#allocation2 + $0x34] sm:$0xf]
        %v1450 = vunpack.c.l.b16 %v1444
        %v1451 = vunpack.c.l.b16 %v1445
        %v1452 = vpack.c.b16 %v1451, %v1450
        %v1454 = vsel %vm1160, %v1148, 0
        %v1457 = vsel %vm1160, %v1452, 0
        %1459 = vmatprep.subr.bf16.mxu0 0
        %1460 = vmatpush1.bf16.xpose.msra.mxu0 0
        %1461 = vmatprep.subr.bf16.mxu0 0
        %1462 = vmatpush1.bf16.xpose.msra.mxu0 0
        %1463 = vmatprep.subr.bf16.mxu0 0
        %1464 = vmatpush1.bf16.xpose.msra.mxu0 0
        %1465 = vmatprep.subr.bf16.mxu0 0
        %1466 = vmatpush1.bf16.xpose.msra.mxu0 0
        %1467 = vmatprep.subr.bf16.mxu0 0
        %1468 = vmatpush1.bf16.xpose.msra.mxu0 0
        %1469 = vmatprep.subr.bf16.mxu0 0
        %1470 = vmatpush1.bf16.xpose.msra.mxu0 0
        %1471 = vmatprep.subr.bf16.mxu0 0
        %1472 = vmatpush1.bf16.xpose.msra.mxu0 0
        %1473 = vmatprep.subr.bf16.mxu0 0
        %1474 = vmatpush1.bf16.xpose.msra.mxu0 %v1457
        %1475 = vmatprep.subr.bf16.mxu0 0
        %1476 = vmatpush2.bf16.xpose.msra.mxu0 0
        %1477 = vmatprep.subr.bf16.mxu0 0
        %1478 = vmatpush2.bf16.xpose.msra.mxu0 0
        %1479 = vmatprep.subr.bf16.mxu0 0
        %1480 = vmatpush2.bf16.xpose.msra.mxu0 0
        %1481 = vmatprep.subr.bf16.mxu0 0
        %1482 = vmatpush2.bf16.xpose.msra.mxu0 0
        %1483 = vmatprep.subr.bf16.mxu0 0
        %1484 = vmatpush2.bf16.xpose.msra.mxu0 0
        %1485 = vmatprep.subr.bf16.mxu0 0
        %1486 = vmatpush2.bf16.xpose.msra.mxu0 0
        %1487 = vmatprep.subr.bf16.mxu0 0
        %1488 = vmatpush2.bf16.xpose.msra.mxu0 0
        %1489 = vmatprep.subr.bf16.mxu0 0
        %1490 = vmatpush2.bf16.xpose.msra.mxu0 0
        %1491 = vmatprep.mubr.bf16.mxu0 0
        %1492 = vmatmul.mubr.bf16.gmra.mxu0 %v1454
        %v1493 = vpop.f32.mrf.mxu0
        %v1494 = vadd.f32 0.0, %v1493
        %v1495 = vpop.f32.mrf.mxu0
        %v1496 = vpop.f32.mrf.mxu0
        %v1497 = vadd.f32 0.0, %v1496
        %v1498 = vpop.f32.mrf.mxu0
        %1499 = vdwg.mxu0
        %v1500 = vsel %vm1208, %v1494, -inf
        %1501 = vmax.xlane.f32.xlu0 %v1500
        %v1502 = vpop.xlane.xlu0 %1501
        %v1503 = vsel %vm1208, %v1497, -inf
        %1504 = vmax.xlane.f32.xlu0 %v1503
        %v1505 = vpop.xlane.xlu0 %1504
        %v1506 = vsub.f32 %v1494, %v1502
        %v1507 = vsub.f32 %v1497, %v1505
        %v1508 = vmul.f32 %v1506, 1.442695
        %v1509 = vpow.pop %v1508
        %v1510 = vmul.f32 %v1507, 1.442695
        %v1511 = vpow.pop %v1510
        %v1512 = vsel %vm1208, %v1509, 0.0
        %1513 = vadd.xlane.f32.xlu0 %v1512
        %v1514 = vpop.xlane.xlu0 %1513
        %v1515 = vsel %vm1208, %v1511, 0.0
        %1516 = vadd.xlane.f32.xlu0 %v1515
        %v1517 = vpop.xlane.xlu0 %1516
        %v1518 = vpack.c.bf16 %v1511, %v1509
        %v1521 = vunpack.c.l.b16 %v1446
        %v1522 = vunpack.c.l.b16 %v1447
        %v1523 = vpack.c.b16 %v1522, %v1521
        %v1526 = vsel %vm1208, %v1518, 0
        %1528 = vmatprep.subr.bf16.mxu0 0
        %1529 = vmatpush1.bf16.msra.mxu0 0
        %1530 = vmatprep.subr.bf16.mxu0 0
        %1531 = vmatpush1.bf16.msra.mxu0 0
        %1532 = vmatprep.subr.bf16.mxu0 0
        %1533 = vmatpush1.bf16.msra.mxu0 0
        %1534 = vmatprep.subr.bf16.mxu0 0
        %1535 = vmatpush1.bf16.msra.mxu0 0
        %1536 = vmatprep.subr.bf16.mxu0 0
        %1537 = vmatpush1.bf16.msra.mxu0 0
        %1538 = vmatprep.subr.bf16.mxu0 0
        %1539 = vmatpush1.bf16.msra.mxu0 0
        %1540 = vmatprep.subr.bf16.mxu0 0
        %1541 = vmatpush1.bf16.msra.mxu0 0
        %1542 = vmatprep.subr.bf16.mxu0 0
        %1543 = vmatpush1.bf16.msra.mxu0 %v1523
        %1544 = vmatprep.subr.bf16.mxu0 0
        %1545 = vmatpush2.bf16.msra.mxu0 0
        %1546 = vmatprep.subr.bf16.mxu0 0
        %1547 = vmatpush2.bf16.msra.mxu0 0
        %1548 = vmatprep.subr.bf16.mxu0 0
        %1549 = vmatpush2.bf16.msra.mxu0 0
        %1550 = vmatprep.subr.bf16.mxu0 0
        %1551 = vmatpush2.bf16.msra.mxu0 0
        %1552 = vmatprep.subr.bf16.mxu0 0
        %1553 = vmatpush2.bf16.msra.mxu0 0
        %1554 = vmatprep.subr.bf16.mxu0 0
        %1555 = vmatpush2.bf16.msra.mxu0 0
        %1556 = vmatprep.subr.bf16.mxu0 0
        %1557 = vmatpush2.bf16.msra.mxu0 0
        %1558 = vmatprep.subr.bf16.mxu0 0
        %1559 = vmatpush2.bf16.msra.mxu0 0
        %1560 = vmatprep.mubr.bf16.mxu0 0
        %1561 = vmatmul.mubr.bf16.gmra.mxu0 %v1526
        %v1562 = vpop.f32.mrf.mxu0
        %v1563 = vadd.f32 0.0, %v1562
        %v1564 = vpop.f32.mrf.mxu0
        %v1565 = vpop.f32.mrf.mxu0
        %v1566 = vadd.f32 0.0, %v1565
        %v1567 = vpop.f32.mrf.mxu0
        %1568 = vdwg.mxu0
        %v1569 = vrcp.pop %v1514
        %v1570 = vrcp.pop %v1517
        %v1571 = vmul.f32 %v1563, %v1569
        %v1572 = vmul.f32 %v1566, %v1570
        %v1573 = vpack.c.bf16 %v1572, %v1571
        %v1575 = vunpack.c.l.b16 %v1573
        %v1576 = vunpack.c.h.b16 %v1573
        %v1577 = vpack.c.b16 %v1575, %v1575
        %v1578 = vpack.c.b16 %v1576, %v1576
        %1581 = vst.msk [vmem:[#allocation3 + $0x4] sm:$0xf] %vm1290, %v1577
        %1582 = vst.msk [vmem:[#allocation3 + $0x14] sm:$0xf] %vm1290, %v1578
        %v1583 = vld [vmem:[#allocation2 + $0x4] sm:$0xf]
        %v1584 = vld [vmem:[#allocation2 + $0x24] sm:$0xf]
        %v1585 = vld [vmem:[#allocation2 + $0x14] sm:$0xf]
        %v1586 = vld [vmem:[#allocation2 + $0x34] sm:$0xf]
        %1588 = vrot.lane.b32.xlu0 %v1148, 64
        %v1589 = vpop.permute.xlu0 %1588
        %v1592 = vunpack.c.l.b16 %v1583
        %v1593 = vunpack.c.l.b16 %v1584
        %v1594 = vpack.c.b16 %v1593, %v1592
        %1595 = vrot.lane.b32.xlu0 %v1594, 64
        %v1596 = vpop.permute.xlu0 %1595
        %v1598 = vsel %vm1160, %v1589, 0
        %v1601 = vsel %vm1160, %v1596, 0
        %1603 = vmatprep.subr.bf16.mxu0 0
        %1604 = vmatpush1.bf16.xpose.msra.mxu0 0
        %1605 = vmatprep.subr.bf16.mxu0 0
        %1606 = vmatpush1.bf16.xpose.msra.mxu0 0
        %1607 = vmatprep.subr.bf16.mxu0 0
        %1608 = vmatpush1.bf16.xpose.msra.mxu0 0
        %1609 = vmatprep.subr.bf16.mxu0 0
        %1610 = vmatpush1.bf16.xpose.msra.mxu0 0
        %1611 = vmatprep.subr.bf16.mxu0 0
        %1612 = vmatpush1.bf16.xpose.msra.mxu0 0
        %1613 = vmatprep.subr.bf16.mxu0 0
        %1614 = vmatpush1.bf16.xpose.msra.mxu0 0
        %1615 = vmatprep.subr.bf16.mxu0 0
        %1616 = vmatpush1.bf16.xpose.msra.mxu0 0
        %1617 = vmatprep.subr.bf16.mxu0 0
        %1618 = vmatpush1.bf16.xpose.msra.mxu0 %v1601
        %1619 = vmatprep.subr.bf16.mxu0 0
        %1620 = vmatpush2.bf16.xpose.msra.mxu0 0
        %1621 = vmatprep.subr.bf16.mxu0 0
        %1622 = vmatpush2.bf16.xpose.msra.mxu0 0
        %1623 = vmatprep.subr.bf16.mxu0 0
        %1624 = vmatpush2.bf16.xpose.msra.mxu0 0
        %1625 = vmatprep.subr.bf16.mxu0 0
        %1626 = vmatpush2.bf16.xpose.msra.mxu0 0
        %1627 = vmatprep.subr.bf16.mxu0 0
        %1628 = vmatpush2.bf16.xpose.msra.mxu0 0
        %1629 = vmatprep.subr.bf16.mxu0 0
        %1630 = vmatpush2.bf16.xpose.msra.mxu0 0
        %1631 = vmatprep.subr.bf16.mxu0 0
        %1632 = vmatpush2.bf16.xpose.msra.mxu0 0
        %1633 = vmatprep.subr.bf16.mxu0 0
        %1634 = vmatpush2.bf16.xpose.msra.mxu0 0
        %1635 = vmatprep.mubr.bf16.mxu0 0
        %1636 = vmatmul.mubr.bf16.gmra.mxu0 %v1598
        %v1637 = vpop.f32.mrf.mxu0
        %v1638 = vadd.f32 0.0, %v1637
        %v1639 = vpop.f32.mrf.mxu0
        %v1640 = vpop.f32.mrf.mxu0
        %v1641 = vadd.f32 0.0, %v1640
        %v1642 = vpop.f32.mrf.mxu0
        %1643 = vdwg.mxu0
        %v1644 = vsel %vm1208, %v1638, -inf
        %1645 = vmax.xlane.f32.xlu0 %v1644
        %v1646 = vpop.xlane.xlu0 %1645
        %v1647 = vsel %vm1208, %v1641, -inf
        %1648 = vmax.xlane.f32.xlu0 %v1647
        %v1649 = vpop.xlane.xlu0 %1648
        %v1650 = vsub.f32 %v1638, %v1646
        %v1651 = vsub.f32 %v1641, %v1649
        %v1652 = vmul.f32 %v1650, 1.442695
        %v1653 = vpow.pop %v1652
        %v1654 = vmul.f32 %v1651, 1.442695
        %v1655 = vpow.pop %v1654
        %v1656 = vsel %vm1208, %v1653, 0.0
        %1657 = vadd.xlane.f32.xlu0 %v1656
        %v1658 = vpop.xlane.xlu0 %1657
        %v1659 = vsel %vm1208, %v1655, 0.0
        %1660 = vadd.xlane.f32.xlu0 %v1659
        %v1661 = vpop.xlane.xlu0 %1660
        %v1662 = vpack.c.bf16 %v1655, %v1653
        %v1665 = vunpack.c.l.b16 %v1585
        %v1666 = vunpack.c.l.b16 %v1586
        %v1667 = vpack.c.b16 %v1666, %v1665
        %1668 = vrot.lane.b32.xlu0 %v1667, 64
        %v1669 = vpop.permute.xlu0 %1668
        %v1672 = vsel %vm1208, %v1662, 0
        %1674 = vmatprep.subr.bf16.mxu0 0
        %1675 = vmatpush1.bf16.msra.mxu0 0
        %1676 = vmatprep.subr.bf16.mxu0 0
        %1677 = vmatpush1.bf16.msra.mxu0 0
        %1678 = vmatprep.subr.bf16.mxu0 0
        %1679 = vmatpush1.bf16.msra.mxu0 0
        %1680 = vmatprep.subr.bf16.mxu0 0
        %1681 = vmatpush1.bf16.msra.mxu0 0
        %1682 = vmatprep.subr.bf16.mxu0 0
        %1683 = vmatpush1.bf16.msra.mxu0 0
        %1684 = vmatprep.subr.bf16.mxu0 0
        %1685 = vmatpush1.bf16.msra.mxu0 0
        %1686 = vmatprep.subr.bf16.mxu0 0
        %1687 = vmatpush1.bf16.msra.mxu0 0
        %1688 = vmatprep.subr.bf16.mxu0 0
        %1689 = vmatpush1.bf16.msra.mxu0 %v1669
        %1690 = vmatprep.subr.bf16.mxu0 0
        %1691 = vmatpush2.bf16.msra.mxu0 0
        %1692 = vmatprep.subr.bf16.mxu0 0
        %1693 = vmatpush2.bf16.msra.mxu0 0
        %1694 = vmatprep.subr.bf16.mxu0 0
        %1695 = vmatpush2.bf16.msra.mxu0 0
        %1696 = vmatprep.subr.bf16.mxu0 0
        %1697 = vmatpush2.bf16.msra.mxu0 0
        %1698 = vmatprep.subr.bf16.mxu0 0
        %1699 = vmatpush2.bf16.msra.mxu0 0
        %1700 = vmatprep.subr.bf16.mxu0 0
        %1701 = vmatpush2.bf16.msra.mxu0 0
        %1702 = vmatprep.subr.bf16.mxu0 0
        %1703 = vmatpush2.bf16.msra.mxu0 0
        %1704 = vmatprep.subr.bf16.mxu0 0
        %1705 = vmatpush2.bf16.msra.mxu0 0
        %1706 = vmatprep.mubr.bf16.mxu0 0
        %1707 = vmatmul.mubr.bf16.gmra.mxu0 %v1672
        %v1708 = vpop.f32.mrf.mxu0
        %v1709 = vadd.f32 0.0, %v1708
        %v1710 = vpop.f32.mrf.mxu0
        %v1711 = vpop.f32.mrf.mxu0
        %v1712 = vadd.f32 0.0, %v1711
        %v1713 = vpop.f32.mrf.mxu0
        %1714 = vdwg.mxu0
        %v1715 = vrcp.pop %v1658
        %v1716 = vrcp.pop %v1661
        %v1717 = vmul.f32 %v1709, %v1715
        %v1718 = vmul.f32 %v1712, %v1716
        %v1719 = vpack.c.bf16 %v1718, %v1717
        %v1721 = vunpack.c.l.b16 %v1719
        %v1722 = vunpack.c.h.b16 %v1719
        %v1723 = vpack.c.b16 %v1721, %v1721
        %v1724 = vpack.c.b16 %v1722, %v1722
        %1725 = vrot.lane.b32.xlu0 %v1723, 64
        %v1726 = vpop.permute.xlu0 %1725
        %1727 = vrot.lane.b32.xlu0 %v1724, 64
        %v1728 = vpop.permute.xlu0 %1727
        %1731 = vst.msk [vmem:[#allocation3 + $0x4] sm:$0xf] %vm1441, %v1726
        %1732 = vst.msk [vmem:[#allocation3 + $0x14] sm:$0xf] %vm1441, %v1728
        %v1733 = vld [vmem:[#allocation2 + $0x8] sm:$0xf]
        %v1734 = vld [vmem:[#allocation2 + $0x28] sm:$0xf]
        %v1735 = vld [vmem:[#allocation2 + $0x18] sm:$0xf]
        %v1736 = vld [vmem:[#allocation2 + $0x38] sm:$0xf]
        %v1739 = vunpack.c.l.b16 %v1733
        %v1740 = vunpack.c.l.b16 %v1734
        %v1741 = vpack.c.b16 %v1740, %v1739
        %v1743 = vsel %vm1160, %v1149, 0
        %v1746 = vsel %vm1160, %v1741, 0
        %1748 = vmatprep.subr.bf16.mxu0 0
        %1749 = vmatpush1.bf16.xpose.msra.mxu0 0
        %1750 = vmatprep.subr.bf16.mxu0 0
        %1751 = vmatpush1.bf16.xpose.msra.mxu0 0
        %1752 = vmatprep.subr.bf16.mxu0 0
        %1753 = vmatpush1.bf16.xpose.msra.mxu0 0
        %1754 = vmatprep.subr.bf16.mxu0 0
        %1755 = vmatpush1.bf16.xpose.msra.mxu0 0
        %1756 = vmatprep.subr.bf16.mxu0 0
        %1757 = vmatpush1.bf16.xpose.msra.mxu0 0
        %1758 = vmatprep.subr.bf16.mxu0 0
        %1759 = vmatpush1.bf16.xpose.msra.mxu0 0
        %1760 = vmatprep.subr.bf16.mxu0 0
        %1761 = vmatpush1.bf16.xpose.msra.mxu0 0
        %1762 = vmatprep.subr.bf16.mxu0 0
        %1763 = vmatpush1.bf16.xpose.msra.mxu0 %v1746
        %1764 = vmatprep.subr.bf16.mxu0 0
        %1765 = vmatpush2.bf16.xpose.msra.mxu0 0
        %1766 = vmatprep.subr.bf16.mxu0 0
        %1767 = vmatpush2.bf16.xpose.msra.mxu0 0
        %1768 = vmatprep.subr.bf16.mxu0 0
        %1769 = vmatpush2.bf16.xpose.msra.mxu0 0
        %1770 = vmatprep.subr.bf16.mxu0 0
        %1771 = vmatpush2.bf16.xpose.msra.mxu0 0
        %1772 = vmatprep.subr.bf16.mxu0 0
        %1773 = vmatpush2.bf16.xpose.msra.mxu0 0
        %1774 = vmatprep.subr.bf16.mxu0 0
        %1775 = vmatpush2.bf16.xpose.msra.mxu0 0
        %1776 = vmatprep.subr.bf16.mxu0 0
        %1777 = vmatpush2.bf16.xpose.msra.mxu0 0
        %1778 = vmatprep.subr.bf16.mxu0 0
        %1779 = vmatpush2.bf16.xpose.msra.mxu0 0
        %1780 = vmatprep.mubr.bf16.mxu0 0
        %1781 = vmatmul.mubr.bf16.gmra.mxu0 %v1743
        %v1782 = vpop.f32.mrf.mxu0
        %v1783 = vadd.f32 0.0, %v1782
        %v1784 = vpop.f32.mrf.mxu0
        %v1785 = vpop.f32.mrf.mxu0
        %v1786 = vadd.f32 0.0, %v1785
        %v1787 = vpop.f32.mrf.mxu0
        %1788 = vdwg.mxu0
        %v1789 = vsel %vm1208, %v1783, -inf
        %1790 = vmax.xlane.f32.xlu0 %v1789
        %v1791 = vpop.xlane.xlu0 %1790
        %v1792 = vsel %vm1208, %v1786, -inf
        %1793 = vmax.xlane.f32.xlu0 %v1792
        %v1794 = vpop.xlane.xlu0 %1793
        %v1795 = vsub.f32 %v1783, %v1791
        %v1796 = vsub.f32 %v1786, %v1794
        %v1797 = vmul.f32 %v1795, 1.442695
        %v1798 = vpow.pop %v1797
        %v1799 = vmul.f32 %v1796, 1.442695
        %v1800 = vpow.pop %v1799
        %v1801 = vsel %vm1208, %v1798, 0.0
        %1802 = vadd.xlane.f32.xlu0 %v1801
        %v1803 = vpop.xlane.xlu0 %1802
        %v1804 = vsel %vm1208, %v1800, 0.0
        %1805 = vadd.xlane.f32.xlu0 %v1804
        %v1806 = vpop.xlane.xlu0 %1805
        %v1807 = vpack.c.bf16 %v1800, %v1798
        %v1810 = vunpack.c.l.b16 %v1735
        %v1811 = vunpack.c.l.b16 %v1736
        %v1812 = vpack.c.b16 %v1811, %v1810
        %v1815 = vsel %vm1208, %v1807, 0
        %1817 = vmatprep.subr.bf16.mxu0 0
        %1818 = vmatpush1.bf16.msra.mxu0 0
        %1819 = vmatprep.subr.bf16.mxu0 0
        %1820 = vmatpush1.bf16.msra.mxu0 0
        %1821 = vmatprep.subr.bf16.mxu0 0
        %1822 = vmatpush1.bf16.msra.mxu0 0
        %1823 = vmatprep.subr.bf16.mxu0 0
        %1824 = vmatpush1.bf16.msra.mxu0 0
        %1825 = vmatprep.subr.bf16.mxu0 0
        %1826 = vmatpush1.bf16.msra.mxu0 0
        %1827 = vmatprep.subr.bf16.mxu0 0
        %1828 = vmatpush1.bf16.msra.mxu0 0
        %1829 = vmatprep.subr.bf16.mxu0 0
        %1830 = vmatpush1.bf16.msra.mxu0 0
        %1831 = vmatprep.subr.bf16.mxu0 0
        %1832 = vmatpush1.bf16.msra.mxu0 %v1812
        %1833 = vmatprep.subr.bf16.mxu0 0
        %1834 = vmatpush2.bf16.msra.mxu0 0
        %1835 = vmatprep.subr.bf16.mxu0 0
        %1836 = vmatpush2.bf16.msra.mxu0 0
        %1837 = vmatprep.subr.bf16.mxu0 0
        %1838 = vmatpush2.bf16.msra.mxu0 0
        %1839 = vmatprep.subr.bf16.mxu0 0
        %1840 = vmatpush2.bf16.msra.mxu0 0
        %1841 = vmatprep.subr.bf16.mxu0 0
        %1842 = vmatpush2.bf16.msra.mxu0 0
        %1843 = vmatprep.subr.bf16.mxu0 0
        %1844 = vmatpush2.bf16.msra.mxu0 0
        %1845 = vmatprep.subr.bf16.mxu0 0
        %1846 = vmatpush2.bf16.msra.mxu0 0
        %1847 = vmatprep.subr.bf16.mxu0 0
        %1848 = vmatpush2.bf16.msra.mxu0 0
        %1849 = vmatprep.mubr.bf16.mxu0 0
        %1850 = vmatmul.mubr.bf16.gmra.mxu0 %v1815
        %v1851 = vpop.f32.mrf.mxu0
        %v1852 = vadd.f32 0.0, %v1851
        %v1853 = vpop.f32.mrf.mxu0
        %v1854 = vpop.f32.mrf.mxu0
        %v1855 = vadd.f32 0.0, %v1854
        %v1856 = vpop.f32.mrf.mxu0
        %1857 = vdwg.mxu0
        %v1858 = vrcp.pop %v1803
        %v1859 = vrcp.pop %v1806
        %v1860 = vmul.f32 %v1852, %v1858
        %v1861 = vmul.f32 %v1855, %v1859
        %v1862 = vpack.c.bf16 %v1861, %v1860
        %v1864 = vunpack.c.l.b16 %v1862
        %v1865 = vunpack.c.h.b16 %v1862
        %v1866 = vpack.c.b16 %v1864, %v1864
        %v1867 = vpack.c.b16 %v1865, %v1865
        %1870 = vst.msk [vmem:[#allocation3 + $0x8] sm:$0xf] %vm1290, %v1866
        %1871 = vst.msk [vmem:[#allocation3 + $0x18] sm:$0xf] %vm1290, %v1867
        %v1872 = vld [vmem:[#allocation2 + $0x8] sm:$0xf]
        %v1873 = vld [vmem:[#allocation2 + $0x28] sm:$0xf]
        %v1874 = vld [vmem:[#allocation2 + $0x18] sm:$0xf]
        %v1875 = vld [vmem:[#allocation2 + $0x38] sm:$0xf]
        %1877 = vrot.lane.b32.xlu0 %v1149, 64
        %v1878 = vpop.permute.xlu0 %1877
        %v1881 = vunpack.c.l.b16 %v1872
        %v1882 = vunpack.c.l.b16 %v1873
        %v1883 = vpack.c.b16 %v1882, %v1881
        %1884 = vrot.lane.b32.xlu0 %v1883, 64
        %v1885 = vpop.permute.xlu0 %1884
        %v1887 = vsel %vm1160, %v1878, 0
        %v1890 = vsel %vm1160, %v1885, 0
        %1892 = vmatprep.subr.bf16.mxu0 0
        %1893 = vmatpush1.bf16.xpose.msra.mxu0 0
        %1894 = vmatprep.subr.bf16.mxu0 0
        %1895 = vmatpush1.bf16.xpose.msra.mxu0 0
        %1896 = vmatprep.subr.bf16.mxu0 0
        %1897 = vmatpush1.bf16.xpose.msra.mxu0 0
        %1898 = vmatprep.subr.bf16.mxu0 0
        %1899 = vmatpush1.bf16.xpose.msra.mxu0 0
        %1900 = vmatprep.subr.bf16.mxu0 0
        %1901 = vmatpush1.bf16.xpose.msra.mxu0 0
        %1902 = vmatprep.subr.bf16.mxu0 0
        %1903 = vmatpush1.bf16.xpose.msra.mxu0 0
        %1904 = vmatprep.subr.bf16.mxu0 0
        %1905 = vmatpush1.bf16.xpose.msra.mxu0 0
        %1906 = vmatprep.subr.bf16.mxu0 0
        %1907 = vmatpush1.bf16.xpose.msra.mxu0 %v1890
        %1908 = vmatprep.subr.bf16.mxu0 0
        %1909 = vmatpush2.bf16.xpose.msra.mxu0 0
        %1910 = vmatprep.subr.bf16.mxu0 0
        %1911 = vmatpush2.bf16.xpose.msra.mxu0 0
        %1912 = vmatprep.subr.bf16.mxu0 0
        %1913 = vmatpush2.bf16.xpose.msra.mxu0 0
        %1914 = vmatprep.subr.bf16.mxu0 0
        %1915 = vmatpush2.bf16.xpose.msra.mxu0 0
        %1916 = vmatprep.subr.bf16.mxu0 0
        %1917 = vmatpush2.bf16.xpose.msra.mxu0 0
        %1918 = vmatprep.subr.bf16.mxu0 0
        %1919 = vmatpush2.bf16.xpose.msra.mxu0 0
        %1920 = vmatprep.subr.bf16.mxu0 0
        %1921 = vmatpush2.bf16.xpose.msra.mxu0 0
        %1922 = vmatprep.subr.bf16.mxu0 0
        %1923 = vmatpush2.bf16.xpose.msra.mxu0 0
        %1924 = vmatprep.mubr.bf16.mxu0 0
        %1925 = vmatmul.mubr.bf16.gmra.mxu0 %v1887
        %v1926 = vpop.f32.mrf.mxu0
        %v1927 = vadd.f32 0.0, %v1926
        %v1928 = vpop.f32.mrf.mxu0
        %v1929 = vpop.f32.mrf.mxu0
        %v1930 = vadd.f32 0.0, %v1929
        %v1931 = vpop.f32.mrf.mxu0
        %1932 = vdwg.mxu0
        %v1933 = vsel %vm1208, %v1927, -inf
        %1934 = vmax.xlane.f32.xlu0 %v1933
        %v1935 = vpop.xlane.xlu0 %1934
        %v1936 = vsel %vm1208, %v1930, -inf
        %1937 = vmax.xlane.f32.xlu0 %v1936
        %v1938 = vpop.xlane.xlu0 %1937
        %v1939 = vsub.f32 %v1927, %v1935
        %v1940 = vsub.f32 %v1930, %v1938
        %v1941 = vmul.f32 %v1939, 1.442695
        %v1942 = vpow.pop %v1941
        %v1943 = vmul.f32 %v1940, 1.442695
        %v1944 = vpow.pop %v1943
        %v1945 = vsel %vm1208, %v1942, 0.0
        %1946 = vadd.xlane.f32.xlu0 %v1945
        %v1947 = vpop.xlane.xlu0 %1946
        %v1948 = vsel %vm1208, %v1944, 0.0
        %1949 = vadd.xlane.f32.xlu0 %v1948
        %v1950 = vpop.xlane.xlu0 %1949
        %v1951 = vpack.c.bf16 %v1944, %v1942
        %v1954 = vunpack.c.l.b16 %v1874
        %v1955 = vunpack.c.l.b16 %v1875
        %v1956 = vpack.c.b16 %v1955, %v1954
        %1957 = vrot.lane.b32.xlu0 %v1956, 64
        %v1958 = vpop.permute.xlu0 %1957
        %v1961 = vsel %vm1208, %v1951, 0
        %1963 = vmatprep.subr.bf16.mxu0 0
        %1964 = vmatpush1.bf16.msra.mxu0 0
        %1965 = vmatprep.subr.bf16.mxu0 0
        %1966 = vmatpush1.bf16.msra.mxu0 0
        %1967 = vmatprep.subr.bf16.mxu0 0
        %1968 = vmatpush1.bf16.msra.mxu0 0
        %1969 = vmatprep.subr.bf16.mxu0 0
        %1970 = vmatpush1.bf16.msra.mxu0 0
        %1971 = vmatprep.subr.bf16.mxu0 0
        %1972 = vmatpush1.bf16.msra.mxu0 0
        %1973 = vmatprep.subr.bf16.mxu0 0
        %1974 = vmatpush1.bf16.msra.mxu0 0
        %1975 = vmatprep.subr.bf16.mxu0 0
        %1976 = vmatpush1.bf16.msra.mxu0 0
        %1977 = vmatprep.subr.bf16.mxu0 0
        %1978 = vmatpush1.bf16.msra.mxu0 %v1958
        %1979 = vmatprep.subr.bf16.mxu0 0
        %1980 = vmatpush2.bf16.msra.mxu0 0
        %1981 = vmatprep.subr.bf16.mxu0 0
        %1982 = vmatpush2.bf16.msra.mxu0 0
        %1983 = vmatprep.subr.bf16.mxu0 0
        %1984 = vmatpush2.bf16.msra.mxu0 0
        %1985 = vmatprep.subr.bf16.mxu0 0
        %1986 = vmatpush2.bf16.msra.mxu0 0
        %1987 = vmatprep.subr.bf16.mxu0 0
        %1988 = vmatpush2.bf16.msra.mxu0 0
        %1989 = vmatprep.subr.bf16.mxu0 0
        %1990 = vmatpush2.bf16.msra.mxu0 0
        %1991 = vmatprep.subr.bf16.mxu0 0
        %1992 = vmatpush2.bf16.msra.mxu0 0
        %1993 = vmatprep.subr.bf16.mxu0 0
        %1994 = vmatpush2.bf16.msra.mxu0 0
        %1995 = vmatprep.mubr.bf16.mxu0 0
        %1996 = vmatmul.mubr.bf16.gmra.mxu0 %v1961
        %v1997 = vpop.f32.mrf.mxu0
        %v1998 = vadd.f32 0.0, %v1997
        %v1999 = vpop.f32.mrf.mxu0
        %v2000 = vpop.f32.mrf.mxu0
        %v2001 = vadd.f32 0.0, %v2000
        %v2002 = vpop.f32.mrf.mxu0
        %2003 = vdwg.mxu0
        %v2004 = vrcp.pop %v1947
        %v2005 = vrcp.pop %v1950
        %v2006 = vmul.f32 %v1998, %v2004
        %v2007 = vmul.f32 %v2001, %v2005
        %v2008 = vpack.c.bf16 %v2007, %v2006
        %v2010 = vunpack.c.l.b16 %v2008
        %v2011 = vunpack.c.h.b16 %v2008
        %v2012 = vpack.c.b16 %v2010, %v2010
        %v2013 = vpack.c.b16 %v2011, %v2011
        %2014 = vrot.lane.b32.xlu0 %v2012, 64
        %v2015 = vpop.permute.xlu0 %2014
        %2016 = vrot.lane.b32.xlu0 %v2013, 64
        %v2017 = vpop.permute.xlu0 %2016
        %2020 = vst.msk [vmem:[#allocation3 + $0x8] sm:$0xf] %vm1441, %v2015
        %2021 = vst.msk [vmem:[#allocation3 + $0x18] sm:$0xf] %vm1441, %v2017
        %v2022 = vld [vmem:[#allocation2 + $0xc] sm:$0xf]
        %v2023 = vld [vmem:[#allocation2 + $0x2c] sm:$0xf]
        %v2024 = vld [vmem:[#allocation2 + $0x1c] sm:$0xf]
        %v2025 = vld [vmem:[#allocation2 + $0x3c] sm:$0xf]
        %v2028 = vunpack.c.l.b16 %v2022
        %v2029 = vunpack.c.l.b16 %v2023
        %v2030 = vpack.c.b16 %v2029, %v2028
        %v2032 = vsel %vm1160, %v1150, 0
        %v2035 = vsel %vm1160, %v2030, 0
        %2037 = vmatprep.subr.bf16.mxu0 0
        %2038 = vmatpush1.bf16.xpose.msra.mxu0 0
        %2039 = vmatprep.subr.bf16.mxu0 0
        %2040 = vmatpush1.bf16.xpose.msra.mxu0 0
        %2041 = vmatprep.subr.bf16.mxu0 0
        %2042 = vmatpush1.bf16.xpose.msra.mxu0 0
        %2043 = vmatprep.subr.bf16.mxu0 0
        %2044 = vmatpush1.bf16.xpose.msra.mxu0 0
        %2045 = vmatprep.subr.bf16.mxu0 0
        %2046 = vmatpush1.bf16.xpose.msra.mxu0 0
        %2047 = vmatprep.subr.bf16.mxu0 0
        %2048 = vmatpush1.bf16.xpose.msra.mxu0 0
        %2049 = vmatprep.subr.bf16.mxu0 0
        %2050 = vmatpush1.bf16.xpose.msra.mxu0 0
        %2051 = vmatprep.subr.bf16.mxu0 0
        %2052 = vmatpush1.bf16.xpose.msra.mxu0 %v2035
        %2053 = vmatprep.subr.bf16.mxu0 0
        %2054 = vmatpush2.bf16.xpose.msra.mxu0 0
        %2055 = vmatprep.subr.bf16.mxu0 0
        %2056 = vmatpush2.bf16.xpose.msra.mxu0 0
        %2057 = vmatprep.subr.bf16.mxu0 0
        %2058 = vmatpush2.bf16.xpose.msra.mxu0 0
        %2059 = vmatprep.subr.bf16.mxu0 0
        %2060 = vmatpush2.bf16.xpose.msra.mxu0 0
        %2061 = vmatprep.subr.bf16.mxu0 0
        %2062 = vmatpush2.bf16.xpose.msra.mxu0 0
        %2063 = vmatprep.subr.bf16.mxu0 0
        %2064 = vmatpush2.bf16.xpose.msra.mxu0 0
        %2065 = vmatprep.subr.bf16.mxu0 0
        %2066 = vmatpush2.bf16.xpose.msra.mxu0 0
        %2067 = vmatprep.subr.bf16.mxu0 0
        %2068 = vmatpush2.bf16.xpose.msra.mxu0 0
        %2069 = vmatprep.mubr.bf16.mxu0 0
        %2070 = vmatmul.mubr.bf16.gmra.mxu0 %v2032
        %v2071 = vpop.f32.mrf.mxu0
        %v2072 = vadd.f32 0.0, %v2071
        %v2073 = vpop.f32.mrf.mxu0
        %v2074 = vpop.f32.mrf.mxu0
        %v2075 = vadd.f32 0.0, %v2074
        %v2076 = vpop.f32.mrf.mxu0
        %2077 = vdwg.mxu0
        %v2078 = vsel %vm1208, %v2072, -inf
        %2079 = vmax.xlane.f32.xlu0 %v2078
        %v2080 = vpop.xlane.xlu0 %2079
        %v2081 = vsel %vm1208, %v2075, -inf
        %2082 = vmax.xlane.f32.xlu0 %v2081
        %v2083 = vpop.xlane.xlu0 %2082
        %v2084 = vsub.f32 %v2072, %v2080
        %v2085 = vsub.f32 %v2075, %v2083
        %v2086 = vmul.f32 %v2084, 1.442695
        %v2087 = vpow.pop %v2086
        %v2088 = vmul.f32 %v2085, 1.442695
        %v2089 = vpow.pop %v2088
        %v2090 = vsel %vm1208, %v2087, 0.0
        %2091 = vadd.xlane.f32.xlu0 %v2090
        %v2092 = vpop.xlane.xlu0 %2091
        %v2093 = vsel %vm1208, %v2089, 0.0
        %2094 = vadd.xlane.f32.xlu0 %v2093
        %v2095 = vpop.xlane.xlu0 %2094
        %v2096 = vpack.c.bf16 %v2089, %v2087
        %v2099 = vunpack.c.l.b16 %v2024
        %v2100 = vunpack.c.l.b16 %v2025
        %v2101 = vpack.c.b16 %v2100, %v2099
        %v2104 = vsel %vm1208, %v2096, 0
        %2106 = vmatprep.subr.bf16.mxu0 0
        %2107 = vmatpush1.bf16.msra.mxu0 0
        %2108 = vmatprep.subr.bf16.mxu0 0
        %2109 = vmatpush1.bf16.msra.mxu0 0
        %2110 = vmatprep.subr.bf16.mxu0 0
        %2111 = vmatpush1.bf16.msra.mxu0 0
        %2112 = vmatprep.subr.bf16.mxu0 0
        %2113 = vmatpush1.bf16.msra.mxu0 0
        %2114 = vmatprep.subr.bf16.mxu0 0
        %2115 = vmatpush1.bf16.msra.mxu0 0
        %2116 = vmatprep.subr.bf16.mxu0 0
        %2117 = vmatpush1.bf16.msra.mxu0 0
        %2118 = vmatprep.subr.bf16.mxu0 0
        %2119 = vmatpush1.bf16.msra.mxu0 0
        %2120 = vmatprep.subr.bf16.mxu0 0
        %2121 = vmatpush1.bf16.msra.mxu0 %v2101
        %2122 = vmatprep.subr.bf16.mxu0 0
        %2123 = vmatpush2.bf16.msra.mxu0 0
        %2124 = vmatprep.subr.bf16.mxu0 0
        %2125 = vmatpush2.bf16.msra.mxu0 0
        %2126 = vmatprep.subr.bf16.mxu0 0
        %2127 = vmatpush2.bf16.msra.mxu0 0
        %2128 = vmatprep.subr.bf16.mxu0 0
        %2129 = vmatpush2.bf16.msra.mxu0 0
        %2130 = vmatprep.subr.bf16.mxu0 0
        %2131 = vmatpush2.bf16.msra.mxu0 0
        %2132 = vmatprep.subr.bf16.mxu0 0
        %2133 = vmatpush2.bf16.msra.mxu0 0
        %2134 = vmatprep.subr.bf16.mxu0 0
        %2135 = vmatpush2.bf16.msra.mxu0 0
        %2136 = vmatprep.subr.bf16.mxu0 0
        %2137 = vmatpush2.bf16.msra.mxu0 0
        %2138 = vmatprep.mubr.bf16.mxu0 0
        %2139 = vmatmul.mubr.bf16.gmra.mxu0 %v2104
        %v2140 = vpop.f32.mrf.mxu0
        %v2141 = vadd.f32 0.0, %v2140
        %v2142 = vpop.f32.mrf.mxu0
        %v2143 = vpop.f32.mrf.mxu0
        %v2144 = vadd.f32 0.0, %v2143
        %v2145 = vpop.f32.mrf.mxu0
        %2146 = vdwg.mxu0
        %v2147 = vrcp.pop %v2092
        %v2148 = vrcp.pop %v2095
        %v2149 = vmul.f32 %v2141, %v2147
        %v2150 = vmul.f32 %v2144, %v2148
        %v2151 = vpack.c.bf16 %v2150, %v2149
        %v2153 = vunpack.c.l.b16 %v2151
        %v2154 = vunpack.c.h.b16 %v2151
        %v2155 = vpack.c.b16 %v2153, %v2153
        %v2156 = vpack.c.b16 %v2154, %v2154
        %2159 = vst.msk [vmem:[#allocation3 + $0xc] sm:$0xf] %vm1290, %v2155
        %2160 = vst.msk [vmem:[#allocation3 + $0x1c] sm:$0xf] %vm1290, %v2156
        %v2161 = vld [vmem:[#allocation2 + $0xc] sm:$0xf]
        %v2162 = vld [vmem:[#allocation2 + $0x2c] sm:$0xf]
        %v2163 = vld [vmem:[#allocation2 + $0x1c] sm:$0xf]
        %v2164 = vld [vmem:[#allocation2 + $0x3c] sm:$0xf]
        %2166 = vrot.lane.b32.xlu0 %v1150, 64
        %v2167 = vpop.permute.xlu0 %2166
        %v2170 = vunpack.c.l.b16 %v2161
        %v2171 = vunpack.c.l.b16 %v2162
        %v2172 = vpack.c.b16 %v2171, %v2170
        %2173 = vrot.lane.b32.xlu0 %v2172, 64
        %v2174 = vpop.permute.xlu0 %2173
        %v2176 = vsel %vm1160, %v2167, 0
        %v2179 = vsel %vm1160, %v2174, 0
        %2181 = vmatprep.subr.bf16.mxu0 0
        %2182 = vmatpush1.bf16.xpose.msra.mxu0 0
        %2183 = vmatprep.subr.bf16.mxu0 0
        %2184 = vmatpush1.bf16.xpose.msra.mxu0 0
        %2185 = vmatprep.subr.bf16.mxu0 0
        %2186 = vmatpush1.bf16.xpose.msra.mxu0 0
        %2187 = vmatprep.subr.bf16.mxu0 0
        %2188 = vmatpush1.bf16.xpose.msra.mxu0 0
        %2189 = vmatprep.subr.bf16.mxu0 0
        %2190 = vmatpush1.bf16.xpose.msra.mxu0 0
        %2191 = vmatprep.subr.bf16.mxu0 0
        %2192 = vmatpush1.bf16.xpose.msra.mxu0 0
        %2193 = vmatprep.subr.bf16.mxu0 0
        %2194 = vmatpush1.bf16.xpose.msra.mxu0 0
        %2195 = vmatprep.subr.bf16.mxu0 0
        %2196 = vmatpush1.bf16.xpose.msra.mxu0 %v2179
        %2197 = vmatprep.subr.bf16.mxu0 0
        %2198 = vmatpush2.bf16.xpose.msra.mxu0 0
        %2199 = vmatprep.subr.bf16.mxu0 0
        %2200 = vmatpush2.bf16.xpose.msra.mxu0 0
        %2201 = vmatprep.subr.bf16.mxu0 0
        %2202 = vmatpush2.bf16.xpose.msra.mxu0 0
        %2203 = vmatprep.subr.bf16.mxu0 0
        %2204 = vmatpush2.bf16.xpose.msra.mxu0 0
        %2205 = vmatprep.subr.bf16.mxu0 0
        %2206 = vmatpush2.bf16.xpose.msra.mxu0 0
        %2207 = vmatprep.subr.bf16.mxu0 0
        %2208 = vmatpush2.bf16.xpose.msra.mxu0 0
        %2209 = vmatprep.subr.bf16.mxu0 0
        %2210 = vmatpush2.bf16.xpose.msra.mxu0 0
        %2211 = vmatprep.subr.bf16.mxu0 0
        %2212 = vmatpush2.bf16.xpose.msra.mxu0 0
        %2213 = vmatprep.mubr.bf16.mxu0 0
        %2214 = vmatmul.mubr.bf16.gmra.mxu0 %v2176
        %v2215 = vpop.f32.mrf.mxu0
        %v2216 = vadd.f32 0.0, %v2215
        %v2217 = vpop.f32.mrf.mxu0
        %v2218 = vpop.f32.mrf.mxu0
        %v2219 = vadd.f32 0.0, %v2218
        %v2220 = vpop.f32.mrf.mxu0
        %2221 = vdwg.mxu0
        %v2222 = vsel %vm1208, %v2216, -inf
        %2223 = vmax.xlane.f32.xlu0 %v2222
        %v2224 = vpop.xlane.xlu0 %2223
        %v2225 = vsel %vm1208, %v2219, -inf
        %2226 = vmax.xlane.f32.xlu0 %v2225
        %v2227 = vpop.xlane.xlu0 %2226
        %v2228 = vsub.f32 %v2216, %v2224
        %v2229 = vsub.f32 %v2219, %v2227
        %v2230 = vmul.f32 %v2228, 1.442695
        %v2231 = vpow.pop %v2230
        %v2232 = vmul.f32 %v2229, 1.442695
        %v2233 = vpow.pop %v2232
        %v2234 = vsel %vm1208, %v2231, 0.0
        %2235 = vadd.xlane.f32.xlu0 %v2234
        %v2236 = vpop.xlane.xlu0 %2235
        %v2237 = vsel %vm1208, %v2233, 0.0
        %2238 = vadd.xlane.f32.xlu0 %v2237
        %v2239 = vpop.xlane.xlu0 %2238
        %v2240 = vpack.c.bf16 %v2233, %v2231
        %v2243 = vunpack.c.l.b16 %v2163
        %v2244 = vunpack.c.l.b16 %v2164
        %v2245 = vpack.c.b16 %v2244, %v2243
        %2246 = vrot.lane.b32.xlu0 %v2245, 64
        %v2247 = vpop.permute.xlu0 %2246
        %v2250 = vsel %vm1208, %v2240, 0
        %2252 = vmatprep.subr.bf16.mxu0 0
        %2253 = vmatpush1.bf16.msra.mxu0 0
        %2254 = vmatprep.subr.bf16.mxu0 0
        %2255 = vmatpush1.bf16.msra.mxu0 0
        %2256 = vmatprep.subr.bf16.mxu0 0
        %2257 = vmatpush1.bf16.msra.mxu0 0
        %2258 = vmatprep.subr.bf16.mxu0 0
        %2259 = vmatpush1.bf16.msra.mxu0 0
        %2260 = vmatprep.subr.bf16.mxu0 0
        %2261 = vmatpush1.bf16.msra.mxu0 0
        %2262 = vmatprep.subr.bf16.mxu0 0
        %2263 = vmatpush1.bf16.msra.mxu0 0
        %2264 = vmatprep.subr.bf16.mxu0 0
        %2265 = vmatpush1.bf16.msra.mxu0 0
        %2266 = vmatprep.subr.bf16.mxu0 0
        %2267 = vmatpush1.bf16.msra.mxu0 %v2247
        %2268 = vmatprep.subr.bf16.mxu0 0
        %2269 = vmatpush2.bf16.msra.mxu0 0
        %2270 = vmatprep.subr.bf16.mxu0 0
        %2271 = vmatpush2.bf16.msra.mxu0 0
        %2272 = vmatprep.subr.bf16.mxu0 0
        %2273 = vmatpush2.bf16.msra.mxu0 0
        %2274 = vmatprep.subr.bf16.mxu0 0
        %2275 = vmatpush2.bf16.msra.mxu0 0
        %2276 = vmatprep.subr.bf16.mxu0 0
        %2277 = vmatpush2.bf16.msra.mxu0 0
        %2278 = vmatprep.subr.bf16.mxu0 0
        %2279 = vmatpush2.bf16.msra.mxu0 0
        %2280 = vmatprep.subr.bf16.mxu0 0
        %2281 = vmatpush2.bf16.msra.mxu0 0
        %2282 = vmatprep.subr.bf16.mxu0 0
        %2283 = vmatpush2.bf16.msra.mxu0 0
        %2284 = vmatprep.mubr.bf16.mxu0 0
        %2285 = vmatmul.mubr.bf16.gmra.mxu0 %v2250
        %v2286 = vpop.f32.mrf.mxu0
        %v2287 = vadd.f32 0.0, %v2286
        %v2288 = vpop.f32.mrf.mxu0
        %v2289 = vpop.f32.mrf.mxu0
        %v2290 = vadd.f32 0.0, %v2289
        %v2291 = vpop.f32.mrf.mxu0
        %2292 = vdwg.mxu0
        %v2293 = vrcp.pop %v2236
        %v2294 = vrcp.pop %v2239
        %v2295 = vmul.f32 %v2287, %v2293
        %v2296 = vmul.f32 %v2290, %v2294
        %v2297 = vpack.c.bf16 %v2296, %v2295
        %v2299 = vunpack.c.l.b16 %v2297
        %v2300 = vunpack.c.h.b16 %v2297
        %v2301 = vpack.c.b16 %v2299, %v2299
        %v2302 = vpack.c.b16 %v2300, %v2300
        %2303 = vrot.lane.b32.xlu0 %v2301, 64
        %v2304 = vpop.permute.xlu0 %2303
        %2305 = vrot.lane.b32.xlu0 %v2302, 64
        %v2306 = vpop.permute.xlu0 %2305
        %2309 = vst.msk [vmem:[#allocation3 + $0xc] sm:$0xf] %vm1441, %v2304
        %2310 = vst.msk [vmem:[#allocation3 + $0x1c] sm:$0xf] %vm1441, %v2306
        %v2311 = vld [vmem:[#allocation3] sm:$0xff]
        %v2312 = vld [vmem:[#allocation3 + $0x8] sm:$0xff]
        %v2313 = vld [vmem:[#allocation3 + $0x10] sm:$0xff]
        %v2314 = vld [vmem:[#allocation3 + $0x18] sm:$0xff]
        %v2315 = vld [vmem:[%s3] sm:$0xf]
        %v2316 = vld [vmem:[%s3 + $0x4] sm:$0xf]
        %v2317 = vld [vmem:[%s3 + $0x8] sm:$0xf]
        %v2318 = vld [vmem:[%s3 + $0xc] sm:$0xf]
        %v2319 = vld [vmem:[%s3 + $0x10] sm:$0xf]
        %v2320 = vld [vmem:[%s3 + $0x14] sm:$0xf]
        %v2321 = vld [vmem:[%s3 + $0x18] sm:$0xf]
        %v2322 = vld [vmem:[%s3 + $0x1c] sm:$0xf]
        %v2323 = vld [vmem:[%s3 + $0x20] sm:$0xf]
        %v2324 = vld [vmem:[%s3 + $0x24] sm:$0xf]
        %v2325 = vld [vmem:[%s3 + $0x28] sm:$0xf]
        %v2326 = vld [vmem:[%s3 + $0x2c] sm:$0xf]
        %v2327 = vld [vmem:[%s3 + $0x30] sm:$0xf]
        %v2328 = vld [vmem:[%s3 + $0x34] sm:$0xf]
        %v2329 = vld [vmem:[%s3 + $0x38] sm:$0xf]
        %v2330 = vld [vmem:[%s3 + $0x3c] sm:$0xf]
        %v2331 = vld [vmem:[%s3 + $0x40] sm:$0xf]
        %v2332 = vld [vmem:[%s3 + $0x44] sm:$0xf]
        %v2333 = vld [vmem:[%s3 + $0x48] sm:$0xf]
        %v2334 = vld [vmem:[%s3 + $0x4c] sm:$0xf]
        %v2335 = vld [vmem:[%s3 + $0x50] sm:$0xf]
        %v2336 = vld [vmem:[%s3 + $0x54] sm:$0xf]
        %v2337 = vld [vmem:[%s3 + $0x58] sm:$0xf]
        %v2338 = vld [vmem:[%s3 + $0x5c] sm:$0xf]
        %v2339 = vld [vmem:[%s3 + $0x60] sm:$0xf]
        %v2340 = vld [vmem:[%s3 + $0x64] sm:$0xf]
        %v2341 = vld [vmem:[%s3 + $0x68] sm:$0xf]
        %v2342 = vld [vmem:[%s3 + $0x6c] sm:$0xf]
        %v2343 = vld [vmem:[%s3 + $0x70] sm:$0xf]
        %v2344 = vld [vmem:[%s3 + $0x74] sm:$0xf]
        %v2345 = vld [vmem:[%s3 + $0x78] sm:$0xf]
        %v2346 = vld [vmem:[%s3 + $0x7c] sm:$0xf]
        %v2347 = vld [vmem:[%s3 + $0x80] sm:$0xf]
        %v2348 = vld [vmem:[%s3 + $0x84] sm:$0xf]
        %v2349 = vld [vmem:[%s3 + $0x88] sm:$0xf]
        %v2350 = vld [vmem:[%s3 + $0x8c] sm:$0xf]
        %v2351 = vld [vmem:[%s3 + $0x90] sm:$0xf]
        %v2352 = vld [vmem:[%s3 + $0x94] sm:$0xf]
        %v2353 = vld [vmem:[%s3 + $0x98] sm:$0xf]
        %v2354 = vld [vmem:[%s3 + $0x9c] sm:$0xf]
        %v2355 = vld [vmem:[%s3 + $0xa0] sm:$0xf]
        %v2356 = vld [vmem:[%s3 + $0xa4] sm:$0xf]
        %v2357 = vld [vmem:[%s3 + $0xa8] sm:$0xf]
        %v2358 = vld [vmem:[%s3 + $0xac] sm:$0xf]
        %v2359 = vld [vmem:[%s3 + $0xb0] sm:$0xf]
        %v2360 = vld [vmem:[%s3 + $0xb4] sm:$0xf]
        %v2361 = vld [vmem:[%s3 + $0xb8] sm:$0xf]
        %v2362 = vld [vmem:[%s3 + $0xbc] sm:$0xf]
        %v2363 = vld [vmem:[%s3 + $0xc0] sm:$0xf]
        %v2364 = vld [vmem:[%s3 + $0xc4] sm:$0xf]
        %v2365 = vld [vmem:[%s3 + $0xc8] sm:$0xf]
        %v2366 = vld [vmem:[%s3 + $0xcc] sm:$0xf]
        %v2367 = vld [vmem:[%s3 + $0xd0] sm:$0xf]
        %v2368 = vld [vmem:[%s3 + $0xd4] sm:$0xf]
        %v2369 = vld [vmem:[%s3 + $0xd8] sm:$0xf]
        %v2370 = vld [vmem:[%s3 + $0xdc] sm:$0xf]
        %v2371 = vld [vmem:[%s3 + $0xe0] sm:$0xf]
        %v2372 = vld [vmem:[%s3 + $0xe4] sm:$0xf]
        %v2373 = vld [vmem:[%s3 + $0xe8] sm:$0xf]
        %v2374 = vld [vmem:[%s3 + $0xec] sm:$0xf]
        %v2375 = vld [vmem:[%s3 + $0xf0] sm:$0xf]
        %v2376 = vld [vmem:[%s3 + $0xf4] sm:$0xf]
        %v2377 = vld [vmem:[%s3 + $0xf8] sm:$0xf]
        %v2378 = vld [vmem:[%s3 + $0xfc] sm:$0xf]
        %v2379 = vld [vmem:[%s4] sm:$0x1]
        %v2381 = vlaneseq
        %v2382 = vshrl.u32 %v2381, 7
        %v2383 = vsub.s32 0, %v2382
        %v2384 = vrot.slane %v2379, %v2383
        %v2390 = vunpack.c.l.b16 %v2311
        %v2391 = vunpack.c.h.b16 %v2311
        %v2392 = vunpack.c.l.b16 %v2312
        %v2393 = vunpack.c.h.b16 %v2312
        %v2394 = vunpack.c.l.b16 %v2313
        %v2395 = vunpack.c.h.b16 %v2313
        %v2396 = vunpack.c.l.b16 %v2314
        %v2397 = vunpack.c.h.b16 %v2314
        %v2398 = vpack.c.b16 %v2394, %v2390
        %v2399 = vpack.c.b16 %v2395, %v2391
        %v2400 = vpack.c.b16 %v2396, %v2392
        %v2401 = vpack.c.b16 %v2397, %v2393
        %v2470 = vunpack.c.l.b16 %v2315
        %v2471 = vunpack.c.l.b16 %v2316
        %v2472 = vunpack.c.l.b16 %v2317
        %v2473 = vunpack.c.l.b16 %v2318
        %v2474 = vunpack.c.l.b16 %v2319
        %v2475 = vunpack.c.l.b16 %v2320
        %v2476 = vunpack.c.l.b16 %v2321
        %v2477 = vunpack.c.l.b16 %v2322
        %v2478 = vunpack.c.l.b16 %v2323
        %v2479 = vunpack.c.l.b16 %v2324
        %v2480 = vunpack.c.l.b16 %v2325
        %v2481 = vunpack.c.l.b16 %v2326
        %v2482 = vunpack.c.l.b16 %v2327
        %v2483 = vunpack.c.l.b16 %v2328
        %v2484 = vunpack.c.l.b16 %v2329
        %v2485 = vunpack.c.l.b16 %v2330
        %v2486 = vunpack.c.l.b16 %v2331
        %v2487 = vunpack.c.l.b16 %v2332
        %v2488 = vunpack.c.l.b16 %v2333
        %v2489 = vunpack.c.l.b16 %v2334
        %v2490 = vunpack.c.l.b16 %v2335
        %v2491 = vunpack.c.l.b16 %v2336
        %v2492 = vunpack.c.l.b16 %v2337
        %v2493 = vunpack.c.l.b16 %v2338
        %v2494 = vunpack.c.l.b16 %v2339
        %v2495 = vunpack.c.l.b16 %v2340
        %v2496 = vunpack.c.l.b16 %v2341
        %v2497 = vunpack.c.l.b16 %v2342
        %v2498 = vunpack.c.l.b16 %v2343
        %v2499 = vunpack.c.l.b16 %v2344
        %v2500 = vunpack.c.l.b16 %v2345
        %v2501 = vunpack.c.l.b16 %v2346
        %v2502 = vunpack.c.l.b16 %v2347
        %v2503 = vunpack.c.l.b16 %v2348
        %v2504 = vunpack.c.l.b16 %v2349
        %v2505 = vunpack.c.l.b16 %v2350
        %v2506 = vunpack.c.l.b16 %v2351
        %v2507 = vunpack.c.l.b16 %v2352
        %v2508 = vunpack.c.l.b16 %v2353
        %v2509 = vunpack.c.l.b16 %v2354
        %v2510 = vunpack.c.l.b16 %v2355
        %v2511 = vunpack.c.l.b16 %v2356
        %v2512 = vunpack.c.l.b16 %v2357
        %v2513 = vunpack.c.l.b16 %v2358
        %v2514 = vunpack.c.l.b16 %v2359
        %v2515 = vunpack.c.l.b16 %v2360
        %v2516 = vunpack.c.l.b16 %v2361
        %v2517 = vunpack.c.l.b16 %v2362
        %v2518 = vunpack.c.l.b16 %v2363
        %v2519 = vunpack.c.l.b16 %v2364
        %v2520 = vunpack.c.l.b16 %v2365
        %v2521 = vunpack.c.l.b16 %v2366
        %v2522 = vunpack.c.l.b16 %v2367
        %v2523 = vunpack.c.l.b16 %v2368
        %v2524 = vunpack.c.l.b16 %v2369
        %v2525 = vunpack.c.l.b16 %v2370
        %v2526 = vunpack.c.l.b16 %v2371
        %v2527 = vunpack.c.l.b16 %v2372
        %v2528 = vunpack.c.l.b16 %v2373
        %v2529 = vunpack.c.l.b16 %v2374
        %v2530 = vunpack.c.l.b16 %v2375
        %v2531 = vunpack.c.l.b16 %v2376
        %v2532 = vunpack.c.l.b16 %v2377
        %v2533 = vunpack.c.l.b16 %v2378
        %v2534 = vpack.c.b16 %v2471, %v2470
        %v2535 = vpack.c.b16 %v2473, %v2472
        %v2536 = vpack.c.b16 %v2475, %v2474
        %v2537 = vpack.c.b16 %v2477, %v2476
        %v2538 = vpack.c.b16 %v2479, %v2478
        %v2539 = vpack.c.b16 %v2481, %v2480
        %v2540 = vpack.c.b16 %v2483, %v2482
        %v2541 = vpack.c.b16 %v2485, %v2484
        %v2542 = vpack.c.b16 %v2487, %v2486
        %v2543 = vpack.c.b16 %v2489, %v2488
        %v2544 = vpack.c.b16 %v2491, %v2490
        %v2545 = vpack.c.b16 %v2493, %v2492
        %v2546 = vpack.c.b16 %v2495, %v2494
        %v2547 = vpack.c.b16 %v2497, %v2496
        %v2548 = vpack.c.b16 %v2499, %v2498
        %v2549 = vpack.c.b16 %v2501, %v2500
        %v2550 = vpack.c.b16 %v2503, %v2502
        %v2551 = vpack.c.b16 %v2505, %v2504
        %v2552 = vpack.c.b16 %v2507, %v2506
        %v2553 = vpack.c.b16 %v2509, %v2508
        %v2554 = vpack.c.b16 %v2511, %v2510
        %v2555 = vpack.c.b16 %v2513, %v2512
        %v2556 = vpack.c.b16 %v2515, %v2514
        %v2557 = vpack.c.b16 %v2517, %v2516
        %v2558 = vpack.c.b16 %v2519, %v2518
        %v2559 = vpack.c.b16 %v2521, %v2520
        %v2560 = vpack.c.b16 %v2523, %v2522
        %v2561 = vpack.c.b16 %v2525, %v2524
        %v2562 = vpack.c.b16 %v2527, %v2526
        %v2563 = vpack.c.b16 %v2529, %v2528
        %v2564 = vpack.c.b16 %v2531, %v2530
        %v2565 = vpack.c.b16 %v2533, %v2532
        %2598 = vmatprep.subr.bf16.mxu0 0
        %2599 = vmatpush1.bf16.msra.mxu0 %v2541
        %2600 = vmatprep.subr.bf16.mxu0 0
        %2601 = vmatpush1.bf16.msra.mxu0 %v2540
        %2602 = vmatprep.subr.bf16.mxu0 0
        %2603 = vmatpush1.bf16.msra.mxu0 %v2539
        %2604 = vmatprep.subr.bf16.mxu0 0
        %2605 = vmatpush1.bf16.msra.mxu0 %v2538
        %2606 = vmatprep.subr.bf16.mxu0 0
        %2607 = vmatpush1.bf16.msra.mxu0 %v2537
        %2608 = vmatprep.subr.bf16.mxu0 0
        %2609 = vmatpush1.bf16.msra.mxu0 %v2536
        %2610 = vmatprep.subr.bf16.mxu0 0
        %2611 = vmatpush1.bf16.msra.mxu0 %v2535
        %2612 = vmatprep.subr.bf16.mxu0 0
        %2613 = vmatpush1.bf16.msra.mxu0 %v2534
        %2614 = vmatprep.subr.bf16.mxu0 0
        %2615 = vmatpush2.bf16.msra.mxu0 %v2549
        %2616 = vmatprep.subr.bf16.mxu0 0
        %2617 = vmatpush2.bf16.msra.mxu0 %v2548
        %2618 = vmatprep.subr.bf16.mxu0 0
        %2619 = vmatpush2.bf16.msra.mxu0 %v2547
        %2620 = vmatprep.subr.bf16.mxu0 0
        %2621 = vmatpush2.bf16.msra.mxu0 %v2546
        %2622 = vmatprep.subr.bf16.mxu0 0
        %2623 = vmatpush2.bf16.msra.mxu0 %v2545
        %2624 = vmatprep.subr.bf16.mxu0 0
        %2625 = vmatpush2.bf16.msra.mxu0 %v2544
        %2626 = vmatprep.subr.bf16.mxu0 0
        %2627 = vmatpush2.bf16.msra.mxu0 %v2543
        %2628 = vmatprep.subr.bf16.mxu0 0
        %2629 = vmatpush2.bf16.msra.mxu0 %v2542
        %2630 = vmatprep.mubr.bf16.mxu0 %v2399
        %2631 = vmatmul.mubr.bf16.gmra.mxu0 %v2398
        %v2632 = vpop.f32.mrf.mxu0
        %v2633 = vadd.f32 %v2384, %v2632
        %v2634 = vpop.f32.mrf.mxu0
        %v2635 = vpop.f32.mrf.mxu0
        %v2636 = vadd.f32 %v2384, %v2635
        %v2637 = vpop.f32.mrf.mxu0
        %2638 = vdwg.mxu0
        %2639 = vmatprep.subr.bf16.mxu0 0
        %2640 = vmatpush1.bf16.msra.mxu0 %v2557
        %2641 = vmatprep.subr.bf16.mxu0 0
        %2642 = vmatpush1.bf16.msra.mxu0 %v2556
        %2643 = vmatprep.subr.bf16.mxu0 0
        %2644 = vmatpush1.bf16.msra.mxu0 %v2555
        %2645 = vmatprep.subr.bf16.mxu0 0
        %2646 = vmatpush1.bf16.msra.mxu0 %v2554
        %2647 = vmatprep.subr.bf16.mxu0 0
        %2648 = vmatpush1.bf16.msra.mxu0 %v2553
        %2649 = vmatprep.subr.bf16.mxu0 0
        %2650 = vmatpush1.bf16.msra.mxu0 %v2552
        %2651 = vmatprep.subr.bf16.mxu0 0
        %2652 = vmatpush1.bf16.msra.mxu0 %v2551
        %2653 = vmatprep.subr.bf16.mxu0 0
        %2654 = vmatpush1.bf16.msra.mxu0 %v2550
        %2655 = vmatprep.subr.bf16.mxu0 0
        %2656 = vmatpush2.bf16.msra.mxu0 %v2565
        %2657 = vmatprep.subr.bf16.mxu0 0
        %2658 = vmatpush2.bf16.msra.mxu0 %v2564
        %2659 = vmatprep.subr.bf16.mxu0 0
        %2660 = vmatpush2.bf16.msra.mxu0 %v2563
        %2661 = vmatprep.subr.bf16.mxu0 0
        %2662 = vmatpush2.bf16.msra.mxu0 %v2562
        %2663 = vmatprep.subr.bf16.mxu0 0
        %2664 = vmatpush2.bf16.msra.mxu0 %v2561
        %2665 = vmatprep.subr.bf16.mxu0 0
        %2666 = vmatpush2.bf16.msra.mxu0 %v2560
        %2667 = vmatprep.subr.bf16.mxu0 0
        %2668 = vmatpush2.bf16.msra.mxu0 %v2559
        %2669 = vmatprep.subr.bf16.mxu0 0
        %2670 = vmatpush2.bf16.msra.mxu0 %v2558
        %2671 = vmatprep.mubr.bf16.mxu0 %v2401
        %2672 = vmatmul.mubr.bf16.gmra.mxu0 %v2400
        %v2673 = vpop.f32.mrf.mxu0
        %v2674 = vadd.f32 %v2633, %v2673
        %v2675 = vpop.f32.mrf.mxu0
        %v2676 = vpop.f32.mrf.mxu0
        %v2677 = vadd.f32 %v2636, %v2676
        %v2678 = vpop.f32.mrf.mxu0
        %2679 = vdwg.mxu0
        %2680 = vst [vmem:[%s231] sm:$0xff] %v2674
        %2681 = vst [vmem:[%s231 + $0x8] sm:$0xff] %v2677
        %s2682 = sand.u32 %s151, 1
        %s2683 = scalar_lea.sflag [#allocation5], %s2682
        %s2684 = sand.u32 %s151, 1
        %s2685 = smul.addr %s2684, 16
        %s2686 = scalar_lea.vmem [#allocation4], %s2685
        // Predicated region
        $region45: #{attention.1} parent=39 // pred_check
          %p2687 = pneg %p161
        $region46: #{attention.1} parent=39 // pred_check_branch
          %2689 = sbr.rel (%p2687) target = $region48
        $region47: #{attention.1} parent=39 // pred_region
          %s2690 = smul.u32 2, %s24
          %s2692 = ssub.s32 256, 256
          %2693 = vsyncadd %s2683, %s2692
          %s2694 = smul.addr %s23, 2
          %s2695 = sadd.s32 %s2690, %s2694
          %s2696 = smul.addr %s2695, 128
          %s2697 = scalar_lea.hbm %s5, %s2696
          %s2698 = sshll.u32 %s2686, 4
          %s2699 = int_to_ptr.vmem [resolvable:$true] %s2698
          %2704 = dma.vmem_to_hbm [thread:$0]  %s2699, 256, %s2697, %s2683, 128, 128, 8
        $region48: #{attention.1} parent=39 // pred_fallthru
          _
      $region40: #{attention.1} parent=5 // pred_fallthru
        _
      %p2705 = scmp.le.s32.totalorder 2, %s14
      // Predicated region
      $region49: #{attention.1} parent=5 // pred_check
        %p2706 = pneg %p2705
      $region50: #{attention.1} parent=5 // pred_check_branch
        %2708 = sbr.rel (%p2706) target = $region52
      $region51: #{attention.1} parent=5 // pred_region
        %s2709 = ssub.s32 %s14, 2
        // Predicated region
        $region53: #{attention.1} parent=51 // pred_check
          %p2710 = pneg %p167
        $region54: #{attention.1} parent=51 // pred_check_branch
          %2712 = sbr.rel (%p2710) target = $region56
        $region55: #{attention.1} parent=51 // pred_region
          %s2713 = sand.u32 %s152, 1
          %s2714 = scalar_lea.sflag [#allocation5], %s2713
          %s2715 = sand.u32 %s152, 1
          %s2716 = smul.addr %s2715, 16
          %s2717 = scalar_lea.vmem [#allocation4], %s2716
          %2718 = dma.done %s2714, 256
        $region56: #{attention.1} parent=51 // pred_fallthru
          _
      $region52: #{attention.1} parent=5 // pred_fallthru
        _
    $region6: #{attention.1} parent=1 // loop_footer
      %s18 = sadd.s32 1, %s14
    $region7: #{attention.1} parent=1 // loop_footer_branch
      %13 = sbr.rel target = $region3
    $region8: #{attention.1} parent=1 // loop_exit
      _
    %2719 = vsyncpa [#allocation5], 1
    %s2720 = scalar_lea.sflag [#allocation5], 1
    %2721 = vsyncpa %s2720, 1

</llo_original>
